<compile_context>
chip_gen: v5e
topology: v5e:2x2
jax: 0.10.0
libtpu: 0.0.40
codegen_flags: <defaults>
</compile_context>

<pallas_src>
import jax
import jax.numpy as jnp
from jax.experimental import pallas as pl
from jax.experimental.pallas import tpu as pltpu


IN_FEATURES = 28 * 28   # 784
HIDDEN = 512
OUT_FEATURES = 10

K_PAD = 896             # 784 padded up to a multiple of 128 (exact zero-pad)
OUT_PAD = 128           # lane-dense output width (true logits in [:, :10])


def _round_up(x, m):
    return ((x + m - 1) // m) * m


def _select_tile_b(batch):
    """Batch tile: large enough to fill the 256-row MXU (v6e/v7x) and amortize
    the ~0.35us per-grid-step overhead, capped so there are >=2 grid steps
    when possible (v7x dual-TC sharding), tiny for tiny-batch inference."""
    if batch <= 32:
        return max(16, _round_up(batch, 16))   # mult of 16 keeps bf16 tiling legal
    half = -(-batch // 2)                      # cdiv(batch, 2)
    if batch <= 1024:
        return min(512, _round_up(half, 128))
    return 512


def mlp_kernel(x_ref, w1_ref, b1_ref, w2_ref, b2_ref, w3_ref, b3_ref, o_ref):
    # Layer 1: Linear(784 -> 512) + ReLU  (bf16 MXU matmul, f32 accumulation)
    h1 = jnp.dot(x_ref[...], w1_ref[...], preferred_element_type=jnp.float32)
    h1 = jnp.maximum(h1 + b1_ref[...], 0.0).astype(jnp.bfloat16)
    # Layer 2: Linear(512 -> 512) + ReLU
    h2 = jnp.dot(h1, w2_ref[...], preferred_element_type=jnp.float32)
    h2 = jnp.maximum(h2 + b2_ref[...], 0.0).astype(jnp.bfloat16)
    # Layer 3: Linear(512 -> 128 padded), unmasked lane-dense store
    out = jnp.dot(h2, w3_ref[...], preferred_element_type=jnp.float32)
    o_ref[...] = out + b3_ref[...]


def prepare_params(params):
    """One-time param layout prep (hoisted out of the per-call path):
    weights pre-transposed [in,out] -> bf16, contraction zero-padded 784->896,
    output width zero-padded 10->128; biases kept f32 as [1, N] rows."""
    w1, b1, w2, b2, w3, b3 = params
    w1_p = jnp.pad(w1.astype(jnp.bfloat16), ((0, K_PAD - IN_FEATURES), (0, 0)))
    w2_p = w2.astype(jnp.bfloat16)
    w3_p = jnp.pad(w3.astype(jnp.bfloat16), ((0, 0), (0, OUT_PAD - OUT_FEATURES)))
    b1_p = b1.astype(jnp.float32).reshape(1, HIDDEN)
    b2_p = b2.astype(jnp.float32).reshape(1, HIDDEN)
    b3_p = jnp.pad(b3.astype(jnp.float32),
                   (0, OUT_PAD - OUT_FEATURES)).reshape(1, OUT_PAD)
    return (w1_p, b1_p, w2_p, b2_p, w3_p, b3_p)


@jax.jit
def cnn_classifier_forward(x, prepared_params):
    """x: [B, C, H, W] float32 (NCHW, C*H*W == 784). Returns logits [B, 10] f32."""
    w1_p, b1_p, w2_p, b2_p, w3_p, b3_p = prepared_params
    batch = x.shape[0]
    tile_b = _select_tile_b(batch)
    grid = (pl.cdiv(batch, tile_b),)

    # Single fused pass over x: flatten, bf16 cast, zero-pad K 784 -> 896.
    # No batch padding: the partial last grid block reads garbage rows whose
    # output rows are simply never used; the contraction dim stays exact zeros.
    x_p = jnp.pad(x.reshape(batch, -1).astype(jnp.bfloat16),
                  ((0, 0), (0, K_PAD - IN_FEATURES)))

    resident = lambda shape: pl.BlockSpec(shape, lambda i: (0, 0))

    b_eff = grid[0] * tile_b
    flops = 2 * b_eff * (K_PAD * HIDDEN + HIDDEN * HIDDEN + HIDDEN * OUT_PAD)
    bytes_accessed = (
        x_p.size * 2 + w1_p.size * 2 + w2_p.size * 2 + w3_p.size * 2
        + (b1_p.size + b2_p.size + b3_p.size) * 4
        + batch * OUT_PAD * 4
    )

    out = pl.pallas_call(
        mlp_kernel,
        out_shape=jax.ShapeDtypeStruct((batch, OUT_PAD), jnp.float32),
        grid=grid,
        in_specs=[
            pl.BlockSpec((tile_b, K_PAD), lambda i: (i, 0)),   # x: tiled over batch
            resident(w1_p.shape), resident(b1_p.shape),        # weights/biases stay
            resident(w2_p.shape), resident(b2_p.shape),        # VMEM-resident across
            resident(w3_p.shape), resident(b3_p.shape),        # the whole grid
        ],
        out_specs=pl.BlockSpec((tile_b, OUT_PAD), lambda i: (i, 0)),
        compiler_params=pltpu.CompilerParams(
            dimension_semantics=("parallel",),   # batch axis shardable across TCs
            vmem_limit_bytes=32 << 20,
        ),
        cost_estimate=pl.CostEstimate(
            flops=flops, transcendentals=0, bytes_accessed=bytes_accessed),
    )(x_p, w1_p, b1_p, w2_p, b2_p, w3_p, b3_p)

    return out[:, :OUT_FEATURES]


def init_params(key):
    """Params matching nn.Linear, stored pre-transposed as [in, out] so the
    kernel computes x @ W + b (== PyTorch x @ W^T + b). Init mimics PyTorch's
    uniform(-1/sqrt(fan_in), 1/sqrt(fan_in))."""
    dims = [(IN_FEATURES, HIDDEN), (HIDDEN, HIDDEN), (HIDDEN, OUT_FEATURES)]
    params = []
    for fan_in, fan_out in dims:
        kw, kb, key = jax.random.split(key, 3)
        bound = 1.0 / float(fan_in) ** 0.5
        w = jax.random.uniform(kw, (fan_in, fan_out), jnp.float32, -bound, bound)
        b = jax.random.uniform(kb, (fan_out,), jnp.float32, -bound, bound)
        params += [w, b]
    return tuple(params)


def reference_forward(x, params):
    """Pure-JAX f32 reference (PyTorch semantics) for correctness check."""
    w1, b1, w2, b2, w3, b3 = params
    h = x.reshape(x.shape[0], -1)
    h = jnp.maximum(h @ w1 + b1, 0.0)
    h = jnp.maximum(h @ w2 + b2, 0.0)
    return h @ w3 + b3


if __name__ == "__main__":
    key = jax.random.PRNGKey(0)
    kx, kx2, kp = jax.random.split(key, 3)

    params = init_params(kp)
    prepared = prepare_params(params)

    # Tiny-batch inference path (B=2): MNIST-like NCHW input implied by 28*28.
    x = jax.random.normal(kx, (2, 1, 28, 28), dtype=jnp.float32)
    out = jax.block_until_ready(cnn_classifier_forward(x, prepared))
    ref = reference_forward(x, params)
    assert out.shape == (2, OUT_FEATURES)
    # bf16 inputs/weights with f32 accumulation -> loosened tolerance vs f32 ref.
    assert jnp.allclose(out, ref, atol=2e-2, rtol=2e-2), "mismatch vs reference (B=2)"

    # Multi-step grid with a partial last block (exercises the batch-pad drop).
    x2 = jax.random.normal(kx2, (160, 1, 28, 28), dtype=jnp.float32)
    out2 = jax.block_until_ready(cnn_classifier_forward(x2, prepared))
    ref2 = reference_forward(x2, params)
    assert out2.shape == (160, OUT_FEATURES)
    assert jnp.allclose(out2, ref2, atol=3e-2, rtol=3e-2), "mismatch vs reference (B=160)"

    print("KERNEL_OK")
</pallas_src>

<mosaic_0001>
module attributes {stable_mosaic.version = 11 : i64} {
  func.func @mlp_kernel(%arg0: i32, %arg1: memref<16x896xbf16, #tpu.memory_space<vmem>>, %arg2: memref<896x512xbf16, #tpu.memory_space<vmem>>, %arg3: memref<1x512xf32, #tpu.memory_space<vmem>>, %arg4: memref<512x512xbf16, #tpu.memory_space<vmem>>, %arg5: memref<1x512xf32, #tpu.memory_space<vmem>>, %arg6: memref<512x128xbf16, #tpu.memory_space<vmem>>, %arg7: memref<1x128xf32, #tpu.memory_space<vmem>>, %arg8: memref<16x128xf32, #tpu.memory_space<vmem>>) attributes {dimension_semantics = [#tpu.dimension_semantics<parallel>], iteration_bounds = array<i64: 1>, scalar_prefetch = 0 : i64, scratch_operands = 0 : i64, tpu.core_type = #tpu.core_type<tc>, window_params = [{transform_indices = @transform_0, window_bounds = array<i64: 16, 896>}, {pipeline_mode = #tpu.pipeline_mode<synchronous>, transform_indices = @transform_1, window_bounds = array<i64: 896, 512>}, {pipeline_mode = #tpu.pipeline_mode<synchronous>, transform_indices = @transform_2, window_bounds = array<i64: 1, 512>}, {pipeline_mode = #tpu.pipeline_mode<synchronous>, transform_indices = @transform_3, window_bounds = array<i64: 512, 512>}, {pipeline_mode = #tpu.pipeline_mode<synchronous>, transform_indices = @transform_4, window_bounds = array<i64: 1, 512>}, {pipeline_mode = #tpu.pipeline_mode<synchronous>, transform_indices = @transform_5, window_bounds = array<i64: 512, 128>}, {pipeline_mode = #tpu.pipeline_mode<synchronous>, transform_indices = @transform_6, window_bounds = array<i64: 1, 128>}, {transform_indices = @transform_7, window_bounds = array<i64: 16, 128>}]} {
    %c0 = arith.constant 0 : index
    %c0_0 = arith.constant 0 : index
    %0 = vector.load %arg1[%c0, %c0_0] : memref<16x896xbf16, #tpu.memory_space<vmem>>, vector<16x896xbf16>
    %c0_1 = arith.constant 0 : index
    %c0_2 = arith.constant 0 : index
    %1 = vector.load %arg2[%c0_1, %c0_2] : memref<896x512xbf16, #tpu.memory_space<vmem>>, vector<896x512xbf16>
    %cst = arith.constant dense<0.000000e+00> : vector<16x512xf32>
    %2 = tpu.matmul %0, %1, %cst {dimension_numbers = #tpu.dot_dimension_numbers<[1], [0], [0], [1], [0, 0, 1, 1], [], []>} : vector<16x896xbf16>, vector<896x512xbf16>, vector<16x512xf32> -> vector<16x512xf32>
    %c0_3 = arith.constant 0 : index
    %c0_4 = arith.constant 0 : index
    %3 = vector.load %arg3[%c0_3, %c0_4] : memref<1x512xf32, #tpu.memory_space<vmem>>, vector<1x512xf32>
    %4 = vector.broadcast %3 : vector<1x512xf32> to vector<16x512xf32>
    %5 = arith.addf %2, %4 : vector<16x512xf32>
    %cst_5 = arith.constant 0.000000e+00 : f32
    %6 = vector.broadcast %cst_5 : f32 to vector<16x512xf32>
    %7 = arith.maximumf %5, %6 : vector<16x512xf32>
    %8 = arith.truncf %7 : vector<16x512xf32> to vector<16x512xbf16>
    %c0_6 = arith.constant 0 : index
    %c0_7 = arith.constant 0 : index
    %9 = vector.load %arg4[%c0_6, %c0_7] : memref<512x512xbf16, #tpu.memory_space<vmem>>, vector<512x512xbf16>
    %cst_8 = arith.constant dense<0.000000e+00> : vector<16x512xf32>
    %10 = tpu.matmul %8, %9, %cst_8 {dimension_numbers = #tpu.dot_dimension_numbers<[1], [0], [0], [1], [0, 0, 1, 1], [], []>} : vector<16x512xbf16>, vector<512x512xbf16>, vector<16x512xf32> -> vector<16x512xf32>
    %c0_9 = arith.constant 0 : index
    %c0_10 = arith.constant 0 : index
    %11 = vector.load %arg5[%c0_9, %c0_10] : memref<1x512xf32, #tpu.memory_space<vmem>>, vector<1x512xf32>
    %12 = vector.broadcast %11 : vector<1x512xf32> to vector<16x512xf32>
    %13 = arith.addf %10, %12 : vector<16x512xf32>
    %cst_11 = arith.constant 0.000000e+00 : f32
    %14 = vector.broadcast %cst_11 : f32 to vector<16x512xf32>
    %15 = arith.maximumf %13, %14 : vector<16x512xf32>
    %16 = arith.truncf %15 : vector<16x512xf32> to vector<16x512xbf16>
    %c0_12 = arith.constant 0 : index
    %c0_13 = arith.constant 0 : index
    %17 = vector.load %arg6[%c0_12, %c0_13] : memref<512x128xbf16, #tpu.memory_space<vmem>>, vector<512x128xbf16>
    %cst_14 = arith.constant dense<0.000000e+00> : vector<16x128xf32>
    %18 = tpu.matmul %16, %17, %cst_14 {dimension_numbers = #tpu.dot_dimension_numbers<[1], [0], [0], [1], [0, 0, 1, 1], [], []>} : vector<16x512xbf16>, vector<512x128xbf16>, vector<16x128xf32> -> vector<16x128xf32>
    %c0_15 = arith.constant 0 : index
    %c0_16 = arith.constant 0 : index
    %19 = vector.load %arg7[%c0_15, %c0_16] : memref<1x128xf32, #tpu.memory_space<vmem>>, vector<1x128xf32>
    %20 = vector.broadcast %19 : vector<1x128xf32> to vector<16x128xf32>
    %21 = arith.addf %18, %20 : vector<16x128xf32>
    %c0_17 = arith.constant 0 : index
    %c0_18 = arith.constant 0 : index
    %22 = vector.load %arg8[%c0_17, %c0_18] : memref<16x128xf32, #tpu.memory_space<vmem>>, vector<16x128xf32>
    tpu.vector_store %arg8[%c0_17, %c0_18], %21 {strides = array<i32>} : memref<16x128xf32, #tpu.memory_space<vmem>>, vector<16x128xf32>,
    return
  }
  func.func @transform_0(%arg0: i32) -> (i32, i32) {
    %c0_i32 = arith.constant 0 : i32
    %c0_i32_0 = arith.constant 0 : i32
    return %arg0, %c0_i32 : i32, i32
  }
  func.func @transform_1(%arg0: i32) -> (i32, i32) {
    %c0_i32 = arith.constant 0 : i32
    %c0_i32_0 = arith.constant 0 : i32
    %c0_i32_1 = arith.constant 0 : i32
    return %c0_i32, %c0_i32_0 : i32, i32
  }
  func.func @transform_2(%arg0: i32) -> (i32, i32) {
    %c0_i32 = arith.constant 0 : i32
    %c0_i32_0 = arith.constant 0 : i32
    %c0_i32_1 = arith.constant 0 : i32
    return %c0_i32, %c0_i32_0 : i32, i32
  }
  func.func @transform_3(%arg0: i32) -> (i32, i32) {
    %c0_i32 = arith.constant 0 : i32
    %c0_i32_0 = arith.constant 0 : i32
    %c0_i32_1 = arith.constant 0 : i32
    return %c0_i32, %c0_i32_0 : i32, i32
  }
  func.func @transform_4(%arg0: i32) -> (i32, i32) {
    %c0_i32 = arith.constant 0 : i32
    %c0_i32_0 = arith.constant 0 : i32
    %c0_i32_1 = arith.constant 0 : i32
    return %c0_i32, %c0_i32_0 : i32, i32
  }
  func.func @transform_5(%arg0: i32) -> (i32, i32) {
    %c0_i32 = arith.constant 0 : i32
    %c0_i32_0 = arith.constant 0 : i32
    %c0_i32_1 = arith.constant 0 : i32
    return %c0_i32, %c0_i32_0 : i32, i32
  }
  func.func @transform_6(%arg0: i32) -> (i32, i32) {
    %c0_i32 = arith.constant 0 : i32
    %c0_i32_0 = arith.constant 0 : i32
    %c0_i32_1 = arith.constant 0 : i32
    return %c0_i32, %c0_i32_0 : i32, i32
  }
  func.func @transform_7(%arg0: i32) -> (i32, i32) {
    %c0_i32 = arith.constant 0 : i32
    %c0_i32_0 = arith.constant 0 : i32
    return %arg0, %c0_i32 : i32, i32
  }
}

</mosaic_0001>

<llo_original>
// kernel: cnn_classifier_forward.1
$region0: #{cnn_classifier_forward.1}
  #allocation0 [shape = 'u32[]', space=smem, size = 0x4, offset = 0x4, fixed_abs, tag = 'smem constant byte address 0x4 - core index']
  #allocation1 [shape = 'u32[72,128]{1,0:T(1,128)}', space=vmem, size = 0x9000, scoped, tag = 'internal scratch']
  %s0 = inlined_call_operand.vmem [shape: bf16[2,896], index: 0, kind: input, shape index: {}]
  %s1 = inlined_call_operand.hbm [shape: bf16[896,512], index: 1, kind: input, shape index: {}]
  %s2 = inlined_call_operand.vmem [shape: f32[1,512], index: 2, kind: input, shape index: {}]
  %s3 = inlined_call_operand.hbm [shape: bf16[512,512], index: 3, kind: input, shape index: {}]
  %s4 = inlined_call_operand.vmem [shape: f32[1,512], index: 4, kind: input, shape index: {}]
  %s5 = inlined_call_operand.hbm [shape: bf16[512,128], index: 5, kind: input, shape index: {}]
  %s6 = inlined_call_operand.vmem [shape: f32[1,128], index: 6, kind: input, shape index: {}]
  %s7 = inlined_call_operand.hbm [shape: f32[2,128], index: 7, kind: output, shape index: {}]
  %s8 = sld [smem:[#allocation0]]
  $region50: #{cnn_classifier_forward.1} parent=0
    _
  %s10 = ssub.s32 1, %s8
  %s11 = scalar_select 0, %s10, %s8
  $region1: #{cnn_classifier_forward.1} parent=0
    #allocation2 [shape = 'u8[917504]{0}', space=vmem, size = 0xe0000, scoped, tag = 'input window, operand 1, single buffered']
    #allocation3 [shape = 's32[1]{0}', space=sflag, size = 0x4, scoped, tag = 'scoped memory for cnn_classifier_forward.1']
    #allocation4 [shape = 's32[1]{0}', space=sflag, size = 0x4, scoped, tag = 'scoped memory for cnn_classifier_forward.1']
    #allocation5 [shape = 'u8[524288]{0}', space=vmem, size = 0x80000, scoped, tag = 'input window, operand 3, single buffered']
    #allocation6 [shape = 's32[1]{0}', space=sflag, size = 0x4, scoped, tag = 'scoped memory for cnn_classifier_forward.1']
    #allocation7 [shape = 'u8[131072]{0}', space=vmem, size = 0x20000, scoped, tag = 'input window, operand 5, single buffered']
    #allocation8 [shape = 'u8[8192]{0}', space=vmem, size = 0x2000, scoped, tag = 'output window, operand 0, single buffered']
    %12 = vsyncpa [#allocation3], 0
    %13 = vsyncpa [#allocation6], 0
    %14 = vsyncpa [#allocation4], 0
    // Predicated region
    $region2: #{cnn_classifier_forward.1} parent=1 // pred_check
      _
    $region3: #{cnn_classifier_forward.1} parent=1 // pred_check_branch
      %16 = sbr.rel (0) target = $region5
    $region4: #{cnn_classifier_forward.1} parent=1 // pred_region
      _
    $region5: #{cnn_classifier_forward.1} parent=1 // pred_fallthru
      _
    // Predicated region
    $region6: #{cnn_classifier_forward.1} parent=1 // pred_check
      _
    $region7: #{cnn_classifier_forward.1} parent=1 // pred_check_branch
      %18 = sbr.rel (0) target = $region9
    $region8: #{cnn_classifier_forward.1} parent=1 // pred_region
      %20 = vsyncadd [#allocation3], 0
      %s21 = sshll.u32 %s1, 4
      %s22 = int_to_ptr.hbm [resolvable:$true] %s21
      %s23 = sshll.u32 [#allocation2], 4
      %s24 = int_to_ptr.vmem [resolvable:$true] %s23
      %29 = dma.hbm_to_vmem [thread:$0]  %s22, 28672, %s24, [#allocation3], 256, 256, 16
    $region9: #{cnn_classifier_forward.1} parent=1 // pred_fallthru
      _
    // Predicated region
    $region10: #{cnn_classifier_forward.1} parent=1 // pred_check
      _
    $region11: #{cnn_classifier_forward.1} parent=1 // pred_check_branch
      %31 = sbr.rel (0) target = $region13
    $region12: #{cnn_classifier_forward.1} parent=1 // pred_region
      _
    $region13: #{cnn_classifier_forward.1} parent=1 // pred_fallthru
      _
    // Predicated region
    $region14: #{cnn_classifier_forward.1} parent=1 // pred_check
      _
    $region15: #{cnn_classifier_forward.1} parent=1 // pred_check_branch
      %33 = sbr.rel (0) target = $region17
    $region16: #{cnn_classifier_forward.1} parent=1 // pred_region
      %35 = vsyncadd [#allocation6], 0
      %s36 = sshll.u32 %s3, 4
      %s37 = int_to_ptr.hbm [resolvable:$true] %s36
      %s38 = sshll.u32 [#allocation5], 4
      %s39 = int_to_ptr.vmem [resolvable:$true] %s38
      %44 = dma.hbm_to_vmem [thread:$0]  %s37, 16384, %s39, [#allocation6], 256, 256, 16
    $region17: #{cnn_classifier_forward.1} parent=1 // pred_fallthru
      _
    // Predicated region
    $region18: #{cnn_classifier_forward.1} parent=1 // pred_check
      _
    $region19: #{cnn_classifier_forward.1} parent=1 // pred_check_branch
      %46 = sbr.rel (0) target = $region21
    $region20: #{cnn_classifier_forward.1} parent=1 // pred_region
      _
    $region21: #{cnn_classifier_forward.1} parent=1 // pred_fallthru
      _
    // Predicated region
    $region22: #{cnn_classifier_forward.1} parent=1 // pred_check
      _
    $region23: #{cnn_classifier_forward.1} parent=1 // pred_check_branch
      %48 = sbr.rel (0) target = $region25
    $region24: #{cnn_classifier_forward.1} parent=1 // pred_region
      %50 = vsyncadd [#allocation6], 0
      %s51 = sshll.u32 %s5, 4
      %s52 = int_to_ptr.hbm [resolvable:$true] %s51
      %s53 = sshll.u32 [#allocation7], 4
      %s54 = int_to_ptr.vmem [resolvable:$true] %s53
      %59 = dma.hbm_to_vmem [thread:$0]  %s52, 4096, %s54, [#allocation6], 64, 64, 4
    $region25: #{cnn_classifier_forward.1} parent=1 // pred_fallthru
      _
    // Predicated region
    $region26: #{cnn_classifier_forward.1} parent=1 // pred_check
      _
    $region27: #{cnn_classifier_forward.1} parent=1 // pred_check_branch
      %61 = sbr.rel (0) target = $region29
    $region28: #{cnn_classifier_forward.1} parent=1 // pred_region
      _
    $region29: #{cnn_classifier_forward.1} parent=1 // pred_fallthru
      _
    // Predicated region
    $region30: #{cnn_classifier_forward.1} parent=1 // pred_check
      _
    $region31: #{cnn_classifier_forward.1} parent=1 // pred_check_branch
      %63 = sbr.rel (0) target = $region33
    $region32: #{cnn_classifier_forward.1} parent=1 // pred_region
      %65 = dma.done [#allocation3], 28672
    $region33: #{cnn_classifier_forward.1} parent=1 // pred_fallthru
      _
    // Predicated region
    $region34: #{cnn_classifier_forward.1} parent=1 // pred_check
      _
    $region35: #{cnn_classifier_forward.1} parent=1 // pred_check_branch
      %67 = sbr.rel (0) target = $region37
    $region36: #{cnn_classifier_forward.1} parent=1 // pred_region
      %69 = dma.done [#allocation6], 16384
    $region37: #{cnn_classifier_forward.1} parent=1 // pred_fallthru
      _
    // Predicated region
    $region38: #{cnn_classifier_forward.1} parent=1 // pred_check
      _
    $region39: #{cnn_classifier_forward.1} parent=1 // pred_check_branch
      %71 = sbr.rel (0) target = $region41
    $region40: #{cnn_classifier_forward.1} parent=1 // pred_region
      %73 = dma.done [#allocation6], 4096
    $region41: #{cnn_classifier_forward.1} parent=1 // pred_fallthru
      _
    %v74 = vld [vmem:[%s0] sm:$0x7f]
    %v75 = vld [vmem:[%s0 + $0x7] sm:$0x7f]
    %v76 = vld [vmem:[%s0 + $0xe] sm:$0x7f]
    %v77 = vld [vmem:[%s0 + $0x15] sm:$0x7f]
    %v78 = vld [vmem:[%s0 + $0x1c] sm:$0x7f]
    %v79 = vld [vmem:[%s0 + $0x23] sm:$0x7f]
    %v80 = vld [vmem:[%s0 + $0x2a] sm:$0x7f]
    %v81 = vld [vmem:[%s0 + $0x31] sm:$0x7f]
    %v82 = vld [vmem:[#allocation2] sm:$0xff]
    %v83 = vld [vmem:[#allocation2 + $0x8] sm:$0xff]
    %v84 = vld [vmem:[#allocation2 + $0x10] sm:$0xff]
    %v85 = vld [vmem:[#allocation2 + $0x18] sm:$0xff]
    %v86 = vld [vmem:[#allocation2 + $0x20] sm:$0xff]
    %v87 = vld [vmem:[#allocation2 + $0x28] sm:$0xff]
    %v88 = vld [vmem:[#allocation2 + $0x30] sm:$0xff]
    %v89 = vld [vmem:[#allocation2 + $0x38] sm:$0xff]
    %v90 = vld [vmem:[#allocation2 + $0x40] sm:$0xff]
    %v91 = vld [vmem:[#allocation2 + $0x48] sm:$0xff]
    %v92 = vld [vmem:[#allocation2 + $0x50] sm:$0xff]
    %v93 = vld [vmem:[#allocation2 + $0x58] sm:$0xff]
    %v94 = vld [vmem:[#allocation2 + $0x60] sm:$0xff]
    %v95 = vld [vmem:[#allocation2 + $0x68] sm:$0xff]
    %v96 = vld [vmem:[#allocation2 + $0x70] sm:$0xff]
    %v97 = vld [vmem:[#allocation2 + $0x78] sm:$0xff]
    %v98 = vld [vmem:[#allocation2 + $0x80] sm:$0xff]
    %v99 = vld [vmem:[#allocation2 + $0x88] sm:$0xff]
    %v100 = vld [vmem:[#allocation2 + $0x90] sm:$0xff]
    %v101 = vld [vmem:[#allocation2 + $0x98] sm:$0xff]
    %v102 = vld [vmem:[#allocation2 + $0xa0] sm:$0xff]
    %v103 = vld [vmem:[#allocation2 + $0xa8] sm:$0xff]
    %v104 = vld [vmem:[#allocation2 + $0xb0] sm:$0xff]
    %v105 = vld [vmem:[#allocation2 + $0xb8] sm:$0xff]
    %v106 = vld [vmem:[#allocation2 + $0xc0] sm:$0xff]
    %v107 = vld [vmem:[#allocation2 + $0xc8] sm:$0xff]
    %v108 = vld [vmem:[#allocation2 + $0xd0] sm:$0xff]
    %v109 = vld [vmem:[#allocation2 + $0xd8] sm:$0xff]
    %v110 = vld [vmem:[#allocation2 + $0xe0] sm:$0xff]
    %v111 = vld [vmem:[#allocation2 + $0xe8] sm:$0xff]
    %v112 = vld [vmem:[#allocation2 + $0xf0] sm:$0xff]
    %v113 = vld [vmem:[#allocation2 + $0xf8] sm:$0xff]
    %v114 = vld [vmem:[#allocation2 + $0x100] sm:$0xff]
    %v115 = vld [vmem:[#allocation2 + $0x108] sm:$0xff]
    %v116 = vld [vmem:[#allocation2 + $0x110] sm:$0xff]
    %v117 = vld [vmem:[#allocation2 + $0x118] sm:$0xff]
    %v118 = vld [vmem:[#allocation2 + $0x120] sm:$0xff]
    %v119 = vld [vmem:[#allocation2 + $0x128] sm:$0xff]
    %v120 = vld [vmem:[#allocation2 + $0x130] sm:$0xff]
    %v121 = vld [vmem:[#allocation2 + $0x138] sm:$0xff]
    %v122 = vld [vmem:[#allocation2 + $0x140] sm:$0xff]
    %v123 = vld [vmem:[#allocation2 + $0x148] sm:$0xff]
    %v124 = vld [vmem:[#allocation2 + $0x150] sm:$0xff]
    %v125 = vld [vmem:[#allocation2 + $0x158] sm:$0xff]
    %v126 = vld [vmem:[#allocation2 + $0x160] sm:$0xff]
    %v127 = vld [vmem:[#allocation2 + $0x168] sm:$0xff]
    %v128 = vld [vmem:[#allocation2 + $0x170] sm:$0xff]
    %v129 = vld [vmem:[#allocation2 + $0x178] sm:$0xff]
    %v130 = vld [vmem:[#allocation2 + $0x180] sm:$0xff]
    %v131 = vld [vmem:[#allocation2 + $0x188] sm:$0xff]
    %v132 = vld [vmem:[#allocation2 + $0x190] sm:$0xff]
    %v133 = vld [vmem:[#allocation2 + $0x198] sm:$0xff]
    %v134 = vld [vmem:[#allocation2 + $0x1a0] sm:$0xff]
    %v135 = vld [vmem:[#allocation2 + $0x1a8] sm:$0xff]
    %v136 = vld [vmem:[#allocation2 + $0x1b0] sm:$0xff]
    %v137 = vld [vmem:[#allocation2 + $0x1b8] sm:$0xff]
    %v138 = vld [vmem:[#allocation2 + $0x1c0] sm:$0xff]
    %v139 = vld [vmem:[#allocation2 + $0x1c8] sm:$0xff]
    %v140 = vld [vmem:[#allocation2 + $0x1d0] sm:$0xff]
    %v141 = vld [vmem:[#allocation2 + $0x1d8] sm:$0xff]
    %v142 = vld [vmem:[#allocation2 + $0x1e0] sm:$0xff]
    %v143 = vld [vmem:[#allocation2 + $0x1e8] sm:$0xff]
    %v144 = vld [vmem:[#allocation2 + $0x1f0] sm:$0xff]
    %v145 = vld [vmem:[#allocation2 + $0x1f8] sm:$0xff]
    %v146 = vld [vmem:[#allocation2 + $0x200] sm:$0xff]
    %v147 = vld [vmem:[#allocation2 + $0x208] sm:$0xff]
    %v148 = vld [vmem:[#allocation2 + $0x210] sm:$0xff]
    %v149 = vld [vmem:[#allocation2 + $0x218] sm:$0xff]
    %v150 = vld [vmem:[#allocation2 + $0x220] sm:$0xff]
    %v151 = vld [vmem:[#allocation2 + $0x228] sm:$0xff]
    %v152 = vld [vmem:[#allocation2 + $0x230] sm:$0xff]
    %v153 = vld [vmem:[#allocation2 + $0x238] sm:$0xff]
    %v154 = vld [vmem:[#allocation2 + $0x240] sm:$0xff]
    %v155 = vld [vmem:[#allocation2 + $0x248] sm:$0xff]
    %v156 = vld [vmem:[#allocation2 + $0x250] sm:$0xff]
    %v157 = vld [vmem:[#allocation2 + $0x258] sm:$0xff]
    %v158 = vld [vmem:[#allocation2 + $0x260] sm:$0xff]
    %v159 = vld [vmem:[#allocation2 + $0x268] sm:$0xff]
    %v160 = vld [vmem:[#allocation2 + $0x270] sm:$0xff]
    %v161 = vld [vmem:[#allocation2 + $0x278] sm:$0xff]
    %v162 = vld [vmem:[#allocation2 + $0x280] sm:$0xff]
    %v163 = vld [vmem:[#allocation2 + $0x288] sm:$0xff]
    %v164 = vld [vmem:[#allocation2 + $0x290] sm:$0xff]
    %v165 = vld [vmem:[#allocation2 + $0x298] sm:$0xff]
    %v166 = vld [vmem:[#allocation2 + $0x2a0] sm:$0xff]
    %v167 = vld [vmem:[#allocation2 + $0x2a8] sm:$0xff]
    %v168 = vld [vmem:[#allocation2 + $0x2b0] sm:$0xff]
    %v169 = vld [vmem:[#allocation2 + $0x2b8] sm:$0xff]
    %v170 = vld [vmem:[#allocation2 + $0x2c0] sm:$0xff]
    %v171 = vld [vmem:[#allocation2 + $0x2c8] sm:$0xff]
    %v172 = vld [vmem:[#allocation2 + $0x2d0] sm:$0xff]
    %v173 = vld [vmem:[#allocation2 + $0x2d8] sm:$0xff]
    %v174 = vld [vmem:[#allocation2 + $0x2e0] sm:$0xff]
    %v175 = vld [vmem:[#allocation2 + $0x2e8] sm:$0xff]
    %v176 = vld [vmem:[#allocation2 + $0x2f0] sm:$0xff]
    %v177 = vld [vmem:[#allocation2 + $0x2f8] sm:$0xff]
    %v178 = vld [vmem:[#allocation2 + $0x300] sm:$0xff]
    %v179 = vld [vmem:[#allocation2 + $0x308] sm:$0xff]
    %v180 = vld [vmem:[#allocation2 + $0x310] sm:$0xff]
    %v181 = vld [vmem:[#allocation2 + $0x318] sm:$0xff]
    %v182 = vld [vmem:[#allocation2 + $0x320] sm:$0xff]
    %v183 = vld [vmem:[#allocation2 + $0x328] sm:$0xff]
    %v184 = vld [vmem:[#allocation2 + $0x330] sm:$0xff]
    %v185 = vld [vmem:[#allocation2 + $0x338] sm:$0xff]
    %v186 = vld [vmem:[#allocation2 + $0x340] sm:$0xff]
    %v187 = vld [vmem:[#allocation2 + $0x348] sm:$0xff]
    %v188 = vld [vmem:[#allocation2 + $0x350] sm:$0xff]
    %v189 = vld [vmem:[#allocation2 + $0x358] sm:$0xff]
    %v190 = vld [vmem:[#allocation2 + $0x360] sm:$0xff]
    %v191 = vld [vmem:[#allocation2 + $0x368] sm:$0xff]
    %v192 = vld [vmem:[#allocation2 + $0x370] sm:$0xff]
    %v193 = vld [vmem:[#allocation2 + $0x378] sm:$0xff]
    %v194 = vld [vmem:[#allocation2 + $0x380] sm:$0xff]
    %v195 = vld [vmem:[#allocation2 + $0x388] sm:$0xff]
    %v196 = vld [vmem:[#allocation2 + $0x390] sm:$0xff]
    %v197 = vld [vmem:[#allocation2 + $0x398] sm:$0xff]
    %v198 = vld [vmem:[#allocation2 + $0x3a0] sm:$0xff]
    %v199 = vld [vmem:[#allocation2 + $0x3a8] sm:$0xff]
    %v200 = vld [vmem:[#allocation2 + $0x3b0] sm:$0xff]
    %v201 = vld [vmem:[#allocation2 + $0x3b8] sm:$0xff]
    %v202 = vld [vmem:[#allocation2 + $0x3c0] sm:$0xff]
    %v203 = vld [vmem:[#allocation2 + $0x3c8] sm:$0xff]
    %v204 = vld [vmem:[#allocation2 + $0x3d0] sm:$0xff]
    %v205 = vld [vmem:[#allocation2 + $0x3d8] sm:$0xff]
    %v206 = vld [vmem:[#allocation2 + $0x3e0] sm:$0xff]
    %v207 = vld [vmem:[#allocation2 + $0x3e8] sm:$0xff]
    %v208 = vld [vmem:[#allocation2 + $0x3f0] sm:$0xff]
    %v209 = vld [vmem:[#allocation2 + $0x3f8] sm:$0xff]
    %v210 = vld [vmem:[#allocation2 + $0x400] sm:$0xff]
    %v211 = vld [vmem:[#allocation2 + $0x408] sm:$0xff]
    %v212 = vld [vmem:[#allocation2 + $0x410] sm:$0xff]
    %v213 = vld [vmem:[#allocation2 + $0x418] sm:$0xff]
    %v214 = vld [vmem:[#allocation2 + $0x420] sm:$0xff]
    %v215 = vld [vmem:[#allocation2 + $0x428] sm:$0xff]
    %v216 = vld [vmem:[#allocation2 + $0x430] sm:$0xff]
    %v217 = vld [vmem:[#allocation2 + $0x438] sm:$0xff]
    %v218 = vld [vmem:[#allocation2 + $0x440] sm:$0xff]
    %v219 = vld [vmem:[#allocation2 + $0x448] sm:$0xff]
    %v220 = vld [vmem:[#allocation2 + $0x450] sm:$0xff]
    %v221 = vld [vmem:[#allocation2 + $0x458] sm:$0xff]
    %v222 = vld [vmem:[#allocation2 + $0x460] sm:$0xff]
    %v223 = vld [vmem:[#allocation2 + $0x468] sm:$0xff]
    %v224 = vld [vmem:[#allocation2 + $0x470] sm:$0xff]
    %v225 = vld [vmem:[#allocation2 + $0x478] sm:$0xff]
    %v226 = vld [vmem:[#allocation2 + $0x480] sm:$0xff]
    %v227 = vld [vmem:[#allocation2 + $0x488] sm:$0xff]
    %v228 = vld [vmem:[#allocation2 + $0x490] sm:$0xff]
    %v229 = vld [vmem:[#allocation2 + $0x498] sm:$0xff]
    %v230 = vld [vmem:[#allocation2 + $0x4a0] sm:$0xff]
    %v231 = vld [vmem:[#allocation2 + $0x4a8] sm:$0xff]
    %v232 = vld [vmem:[#allocation2 + $0x4b0] sm:$0xff]
    %v233 = vld [vmem:[#allocation2 + $0x4b8] sm:$0xff]
    %v234 = vld [vmem:[#allocation2 + $0x4c0] sm:$0xff]
    %v235 = vld [vmem:[#allocation2 + $0x4c8] sm:$0xff]
    %v236 = vld [vmem:[#allocation2 + $0x4d0] sm:$0xff]
    %v237 = vld [vmem:[#allocation2 + $0x4d8] sm:$0xff]
    %v238 = vld [vmem:[#allocation2 + $0x4e0] sm:$0xff]
    %v239 = vld [vmem:[#allocation2 + $0x4e8] sm:$0xff]
    %v240 = vld [vmem:[#allocation2 + $0x4f0] sm:$0xff]
    %v241 = vld [vmem:[#allocation2 + $0x4f8] sm:$0xff]
    %v242 = vld [vmem:[#allocation2 + $0x500] sm:$0xff]
    %v243 = vld [vmem:[#allocation2 + $0x508] sm:$0xff]
    %v244 = vld [vmem:[#allocation2 + $0x510] sm:$0xff]
    %v245 = vld [vmem:[#allocation2 + $0x518] sm:$0xff]
    %v246 = vld [vmem:[#allocation2 + $0x520] sm:$0xff]
    %v247 = vld [vmem:[#allocation2 + $0x528] sm:$0xff]
    %v248 = vld [vmem:[#allocation2 + $0x530] sm:$0xff]
    %v249 = vld [vmem:[#allocation2 + $0x538] sm:$0xff]
    %v250 = vld [vmem:[#allocation2 + $0x540] sm:$0xff]
    %v251 = vld [vmem:[#allocation2 + $0x548] sm:$0xff]
    %v252 = vld [vmem:[#allocation2 + $0x550] sm:$0xff]
    %v253 = vld [vmem:[#allocation2 + $0x558] sm:$0xff]
    %v254 = vld [vmem:[#allocation2 + $0x560] sm:$0xff]
    %v255 = vld [vmem:[#allocation2 + $0x568] sm:$0xff]
    %v256 = vld [vmem:[#allocation2 + $0x570] sm:$0xff]
    %v257 = vld [vmem:[#allocation2 + $0x578] sm:$0xff]
    %v258 = vld [vmem:[#allocation2 + $0x580] sm:$0xff]
    %v259 = vld [vmem:[#allocation2 + $0x588] sm:$0xff]
    %v260 = vld [vmem:[#allocation2 + $0x590] sm:$0xff]
    %v261 = vld [vmem:[#allocation2 + $0x598] sm:$0xff]
    %v262 = vld [vmem:[#allocation2 + $0x5a0] sm:$0xff]
    %v263 = vld [vmem:[#allocation2 + $0x5a8] sm:$0xff]
    %v264 = vld [vmem:[#allocation2 + $0x5b0] sm:$0xff]
    %v265 = vld [vmem:[#allocation2 + $0x5b8] sm:$0xff]
    %v266 = vld [vmem:[#allocation2 + $0x5c0] sm:$0xff]
    %v267 = vld [vmem:[#allocation2 + $0x5c8] sm:$0xff]
    %v268 = vld [vmem:[#allocation2 + $0x5d0] sm:$0xff]
    %v269 = vld [vmem:[#allocation2 + $0x5d8] sm:$0xff]
    %v270 = vld [vmem:[#allocation2 + $0x5e0] sm:$0xff]
    %v271 = vld [vmem:[#allocation2 + $0x5e8] sm:$0xff]
    %v272 = vld [vmem:[#allocation2 + $0x5f0] sm:$0xff]
    %v273 = vld [vmem:[#allocation2 + $0x5f8] sm:$0xff]
    %v274 = vld [vmem:[#allocation2 + $0x600] sm:$0xff]
    %v275 = vld [vmem:[#allocation2 + $0x608] sm:$0xff]
    %v276 = vld [vmem:[#allocation2 + $0x610] sm:$0xff]
    %v277 = vld [vmem:[#allocation2 + $0x618] sm:$0xff]
    %v278 = vld [vmem:[#allocation2 + $0x620] sm:$0xff]
    %v279 = vld [vmem:[#allocation2 + $0x628] sm:$0xff]
    %v280 = vld [vmem:[#allocation2 + $0x630] sm:$0xff]
    %v281 = vld [vmem:[#allocation2 + $0x638] sm:$0xff]
    %v282 = vld [vmem:[#allocation2 + $0x640] sm:$0xff]
    %v283 = vld [vmem:[#allocation2 + $0x648] sm:$0xff]
    %v284 = vld [vmem:[#allocation2 + $0x650] sm:$0xff]
    %v285 = vld [vmem:[#allocation2 + $0x658] sm:$0xff]
    %v286 = vld [vmem:[#allocation2 + $0x660] sm:$0xff]
    %v287 = vld [vmem:[#allocation2 + $0x668] sm:$0xff]
    %v288 = vld [vmem:[#allocation2 + $0x670] sm:$0xff]
    %v289 = vld [vmem:[#allocation2 + $0x678] sm:$0xff]
    %v290 = vld [vmem:[#allocation2 + $0x680] sm:$0xff]
    %v291 = vld [vmem:[#allocation2 + $0x688] sm:$0xff]
    %v292 = vld [vmem:[#allocation2 + $0x690] sm:$0xff]
    %v293 = vld [vmem:[#allocation2 + $0x698] sm:$0xff]
    %v294 = vld [vmem:[#allocation2 + $0x6a0] sm:$0xff]
    %v295 = vld [vmem:[#allocation2 + $0x6a8] sm:$0xff]
    %v296 = vld [vmem:[#allocation2 + $0x6b0] sm:$0xff]
    %v297 = vld [vmem:[#allocation2 + $0x6b8] sm:$0xff]
    %v298 = vld [vmem:[#allocation2 + $0x6c0] sm:$0xff]
    %v299 = vld [vmem:[#allocation2 + $0x6c8] sm:$0xff]
    %v300 = vld [vmem:[#allocation2 + $0x6d0] sm:$0xff]
    %v301 = vld [vmem:[#allocation2 + $0x6d8] sm:$0xff]
    %v302 = vld [vmem:[#allocation2 + $0x6e0] sm:$0xff]
    %v303 = vld [vmem:[#allocation2 + $0x6e8] sm:$0xff]
    %v304 = vld [vmem:[#allocation2 + $0x6f0] sm:$0xff]
    %v305 = vld [vmem:[#allocation2 + $0x6f8] sm:$0xff]
    %v306 = vld [vmem:[%s2] sm:$0xf]
    %v308 = vperm.slane %v306, 0
    %v309 = vperm.slane %v306, 1
    %v310 = vperm.slane %v306, 2
    %v311 = vperm.slane %v306, 3
    %317 = vst [vmem:[#allocation1] ss:$9 sm:$0xff] %v74
    %s319 = scalar_lea.vmem [#allocation1], 1
    %320 = vst [vmem:[%s319] ss:$9 sm:$0xff] %v75
    %s322 = scalar_lea.vmem [#allocation1], 2
    %323 = vst [vmem:[%s322] ss:$9 sm:$0xff] %v76
    %s325 = scalar_lea.vmem [#allocation1], 3
    %326 = vst [vmem:[%s325] ss:$9 sm:$0xff] %v77
    %s328 = scalar_lea.vmem [#allocation1], 4
    %329 = vst [vmem:[%s328] ss:$9 sm:$0xff] %v78
    %s331 = scalar_lea.vmem [#allocation1], 5
    %332 = vst [vmem:[%s331] ss:$9 sm:$0xff] %v79
    %s334 = scalar_lea.vmem [#allocation1], 6
    %335 = vst [vmem:[%s334] ss:$9 sm:$0xff] %v80
    %s337 = scalar_lea.vmem [#allocation1], 7
    %338 = vst [vmem:[%s337] ss:$9 sm:$0xff] %v81
    %v339 = vld [vmem:[#allocation1] sm:$0xff]
    %v340 = vld [vmem:[#allocation1 + $0x9] sm:$0xff]
    %v341 = vld [vmem:[#allocation1 + $0x12] sm:$0xff]
    %v342 = vld [vmem:[#allocation1 + $0x1b] sm:$0xff]
    %v343 = vld [vmem:[#allocation1 + $0x24] sm:$0xff]
    %v344 = vld [vmem:[#allocation1 + $0x2d] sm:$0xff]
    %v345 = vld [vmem:[#allocation1 + $0x36] sm:$0xff]
    %v577 = vunpack.c.l.b16 %v82
    %v578 = vunpack.c.h.b16 %v82
    %v579 = vunpack.c.l.b16 %v83
    %v580 = vunpack.c.h.b16 %v83
    %v581 = vunpack.c.l.b16 %v84
    %v582 = vunpack.c.h.b16 %v84
    %v583 = vunpack.c.l.b16 %v85
    %v584 = vunpack.c.h.b16 %v85
    %v585 = vunpack.c.l.b16 %v86
    %v586 = vunpack.c.h.b16 %v86
    %v587 = vunpack.c.l.b16 %v87
    %v588 = vunpack.c.h.b16 %v87
    %v589 = vunpack.c.l.b16 %v88
    %v590 = vunpack.c.h.b16 %v88
    %v591 = vunpack.c.l.b16 %v89
    %v592 = vunpack.c.h.b16 %v89
    %v593 = vunpack.c.l.b16 %v90
    %v594 = vunpack.c.h.b16 %v90
    %v595 = vunpack.c.l.b16 %v91
    %v596 = vunpack.c.h.b16 %v91
    %v597 = vunpack.c.l.b16 %v92
    %v598 = vunpack.c.h.b16 %v92
    %v599 = vunpack.c.l.b16 %v93
    %v600 = vunpack.c.h.b16 %v93
    %v601 = vunpack.c.l.b16 %v94
    %v602 = vunpack.c.h.b16 %v94
    %v603 = vunpack.c.l.b16 %v95
    %v604 = vunpack.c.h.b16 %v95
    %v605 = vunpack.c.l.b16 %v96
    %v606 = vunpack.c.h.b16 %v96
    %v607 = vunpack.c.l.b16 %v97
    %v608 = vunpack.c.h.b16 %v97
    %v609 = vunpack.c.l.b16 %v98
    %v610 = vunpack.c.h.b16 %v98
    %v611 = vunpack.c.l.b16 %v99
    %v612 = vunpack.c.h.b16 %v99
    %v613 = vunpack.c.l.b16 %v100
    %v614 = vunpack.c.h.b16 %v100
    %v615 = vunpack.c.l.b16 %v101
    %v616 = vunpack.c.h.b16 %v101
    %v617 = vunpack.c.l.b16 %v102
    %v618 = vunpack.c.h.b16 %v102
    %v619 = vunpack.c.l.b16 %v103
    %v620 = vunpack.c.h.b16 %v103
    %v621 = vunpack.c.l.b16 %v104
    %v622 = vunpack.c.h.b16 %v104
    %v623 = vunpack.c.l.b16 %v105
    %v624 = vunpack.c.h.b16 %v105
    %v625 = vunpack.c.l.b16 %v106
    %v626 = vunpack.c.h.b16 %v106
    %v627 = vunpack.c.l.b16 %v107
    %v628 = vunpack.c.h.b16 %v107
    %v629 = vunpack.c.l.b16 %v108
    %v630 = vunpack.c.h.b16 %v108
    %v631 = vunpack.c.l.b16 %v109
    %v632 = vunpack.c.h.b16 %v109
    %v633 = vunpack.c.l.b16 %v110
    %v634 = vunpack.c.h.b16 %v110
    %v635 = vunpack.c.l.b16 %v111
    %v636 = vunpack.c.h.b16 %v111
    %v637 = vunpack.c.l.b16 %v112
    %v638 = vunpack.c.h.b16 %v112
    %v639 = vunpack.c.l.b16 %v113
    %v640 = vunpack.c.h.b16 %v113
    %v641 = vunpack.c.l.b16 %v114
    %v642 = vunpack.c.h.b16 %v114
    %v643 = vunpack.c.l.b16 %v115
    %v644 = vunpack.c.h.b16 %v115
    %v645 = vunpack.c.l.b16 %v116
    %v646 = vunpack.c.h.b16 %v116
    %v647 = vunpack.c.l.b16 %v117
    %v648 = vunpack.c.h.b16 %v117
    %v649 = vunpack.c.l.b16 %v118
    %v650 = vunpack.c.h.b16 %v118
    %v651 = vunpack.c.l.b16 %v119
    %v652 = vunpack.c.h.b16 %v119
    %v653 = vunpack.c.l.b16 %v120
    %v654 = vunpack.c.h.b16 %v120
    %v655 = vunpack.c.l.b16 %v121
    %v656 = vunpack.c.h.b16 %v121
    %v657 = vunpack.c.l.b16 %v122
    %v658 = vunpack.c.h.b16 %v122
    %v659 = vunpack.c.l.b16 %v123
    %v660 = vunpack.c.h.b16 %v123
    %v661 = vunpack.c.l.b16 %v124
    %v662 = vunpack.c.h.b16 %v124
    %v663 = vunpack.c.l.b16 %v125
    %v664 = vunpack.c.h.b16 %v125
    %v665 = vunpack.c.l.b16 %v126
    %v666 = vunpack.c.h.b16 %v126
    %v667 = vunpack.c.l.b16 %v127
    %v668 = vunpack.c.h.b16 %v127
    %v669 = vunpack.c.l.b16 %v128
    %v670 = vunpack.c.h.b16 %v128
    %v671 = vunpack.c.l.b16 %v129
    %v672 = vunpack.c.h.b16 %v129
    %v673 = vunpack.c.l.b16 %v130
    %v674 = vunpack.c.h.b16 %v130
    %v675 = vunpack.c.l.b16 %v131
    %v676 = vunpack.c.h.b16 %v131
    %v677 = vunpack.c.l.b16 %v132
    %v678 = vunpack.c.h.b16 %v132
    %v679 = vunpack.c.l.b16 %v133
    %v680 = vunpack.c.h.b16 %v133
    %v681 = vunpack.c.l.b16 %v134
    %v682 = vunpack.c.h.b16 %v134
    %v683 = vunpack.c.l.b16 %v135
    %v684 = vunpack.c.h.b16 %v135
    %v685 = vunpack.c.l.b16 %v136
    %v686 = vunpack.c.h.b16 %v136
    %v687 = vunpack.c.l.b16 %v137
    %v688 = vunpack.c.h.b16 %v137
    %v689 = vunpack.c.l.b16 %v138
    %v690 = vunpack.c.h.b16 %v138
    %v691 = vunpack.c.l.b16 %v139
    %v692 = vunpack.c.h.b16 %v139
    %v693 = vunpack.c.l.b16 %v140
    %v694 = vunpack.c.h.b16 %v140
    %v695 = vunpack.c.l.b16 %v141
    %v696 = vunpack.c.h.b16 %v141
    %v697 = vunpack.c.l.b16 %v142
    %v698 = vunpack.c.h.b16 %v142
    %v699 = vunpack.c.l.b16 %v143
    %v700 = vunpack.c.h.b16 %v143
    %v701 = vunpack.c.l.b16 %v144
    %v702 = vunpack.c.h.b16 %v144
    %v703 = vunpack.c.l.b16 %v145
    %v704 = vunpack.c.h.b16 %v145
    %v705 = vunpack.c.l.b16 %v146
    %v706 = vunpack.c.h.b16 %v146
    %v707 = vunpack.c.l.b16 %v147
    %v708 = vunpack.c.h.b16 %v147
    %v709 = vunpack.c.l.b16 %v148
    %v710 = vunpack.c.h.b16 %v148
    %v711 = vunpack.c.l.b16 %v149
    %v712 = vunpack.c.h.b16 %v149
    %v713 = vunpack.c.l.b16 %v150
    %v714 = vunpack.c.h.b16 %v150
    %v715 = vunpack.c.l.b16 %v151
    %v716 = vunpack.c.h.b16 %v151
    %v717 = vunpack.c.l.b16 %v152
    %v718 = vunpack.c.h.b16 %v152
    %v719 = vunpack.c.l.b16 %v153
    %v720 = vunpack.c.h.b16 %v153
    %v721 = vunpack.c.l.b16 %v154
    %v722 = vunpack.c.h.b16 %v154
    %v723 = vunpack.c.l.b16 %v155
    %v724 = vunpack.c.h.b16 %v155
    %v725 = vunpack.c.l.b16 %v156
    %v726 = vunpack.c.h.b16 %v156
    %v727 = vunpack.c.l.b16 %v157
    %v728 = vunpack.c.h.b16 %v157
    %v729 = vunpack.c.l.b16 %v158
    %v730 = vunpack.c.h.b16 %v158
    %v731 = vunpack.c.l.b16 %v159
    %v732 = vunpack.c.h.b16 %v159
    %v733 = vunpack.c.l.b16 %v160
    %v734 = vunpack.c.h.b16 %v160
    %v735 = vunpack.c.l.b16 %v161
    %v736 = vunpack.c.h.b16 %v161
    %v737 = vunpack.c.l.b16 %v162
    %v738 = vunpack.c.h.b16 %v162
    %v739 = vunpack.c.l.b16 %v163
    %v740 = vunpack.c.h.b16 %v163
    %v741 = vunpack.c.l.b16 %v164
    %v742 = vunpack.c.h.b16 %v164
    %v743 = vunpack.c.l.b16 %v165
    %v744 = vunpack.c.h.b16 %v165
    %v745 = vunpack.c.l.b16 %v166
    %v746 = vunpack.c.h.b16 %v166
    %v747 = vunpack.c.l.b16 %v167
    %v748 = vunpack.c.h.b16 %v167
    %v749 = vunpack.c.l.b16 %v168
    %v750 = vunpack.c.h.b16 %v168
    %v751 = vunpack.c.l.b16 %v169
    %v752 = vunpack.c.h.b16 %v169
    %v753 = vunpack.c.l.b16 %v170
    %v754 = vunpack.c.h.b16 %v170
    %v755 = vunpack.c.l.b16 %v171
    %v756 = vunpack.c.h.b16 %v171
    %v757 = vunpack.c.l.b16 %v172
    %v758 = vunpack.c.h.b16 %v172
    %v759 = vunpack.c.l.b16 %v173
    %v760 = vunpack.c.h.b16 %v173
    %v761 = vunpack.c.l.b16 %v174
    %v762 = vunpack.c.h.b16 %v174
    %v763 = vunpack.c.l.b16 %v175
    %v764 = vunpack.c.h.b16 %v175
    %v765 = vunpack.c.l.b16 %v176
    %v766 = vunpack.c.h.b16 %v176
    %v767 = vunpack.c.l.b16 %v177
    %v768 = vunpack.c.h.b16 %v177
    %v769 = vunpack.c.l.b16 %v178
    %v770 = vunpack.c.h.b16 %v178
    %v771 = vunpack.c.l.b16 %v179
    %v772 = vunpack.c.h.b16 %v179
    %v773 = vunpack.c.l.b16 %v180
    %v774 = vunpack.c.h.b16 %v180
    %v775 = vunpack.c.l.b16 %v181
    %v776 = vunpack.c.h.b16 %v181
    %v777 = vunpack.c.l.b16 %v182
    %v778 = vunpack.c.h.b16 %v182
    %v779 = vunpack.c.l.b16 %v183
    %v780 = vunpack.c.h.b16 %v183
    %v781 = vunpack.c.l.b16 %v184
    %v782 = vunpack.c.h.b16 %v184
    %v783 = vunpack.c.l.b16 %v185
    %v784 = vunpack.c.h.b16 %v185
    %v785 = vunpack.c.l.b16 %v186
    %v786 = vunpack.c.h.b16 %v186
    %v787 = vunpack.c.l.b16 %v187
    %v788 = vunpack.c.h.b16 %v187
    %v789 = vunpack.c.l.b16 %v188
    %v790 = vunpack.c.h.b16 %v188
    %v791 = vunpack.c.l.b16 %v189
    %v792 = vunpack.c.h.b16 %v189
    %v793 = vunpack.c.l.b16 %v190
    %v794 = vunpack.c.h.b16 %v190
    %v795 = vunpack.c.l.b16 %v191
    %v796 = vunpack.c.h.b16 %v191
    %v797 = vunpack.c.l.b16 %v192
    %v798 = vunpack.c.h.b16 %v192
    %v799 = vunpack.c.l.b16 %v193
    %v800 = vunpack.c.h.b16 %v193
    %v801 = vunpack.c.l.b16 %v194
    %v802 = vunpack.c.h.b16 %v194
    %v803 = vunpack.c.l.b16 %v195
    %v804 = vunpack.c.h.b16 %v195
    %v805 = vunpack.c.l.b16 %v196
    %v806 = vunpack.c.h.b16 %v196
    %v807 = vunpack.c.l.b16 %v197
    %v808 = vunpack.c.h.b16 %v197
    %v809 = vunpack.c.l.b16 %v198
    %v810 = vunpack.c.h.b16 %v198
    %v811 = vunpack.c.l.b16 %v199
    %v812 = vunpack.c.h.b16 %v199
    %v813 = vunpack.c.l.b16 %v200
    %v814 = vunpack.c.h.b16 %v200
    %v815 = vunpack.c.l.b16 %v201
    %v816 = vunpack.c.h.b16 %v201
    %v817 = vunpack.c.l.b16 %v202
    %v818 = vunpack.c.h.b16 %v202
    %v819 = vunpack.c.l.b16 %v203
    %v820 = vunpack.c.h.b16 %v203
    %v821 = vunpack.c.l.b16 %v204
    %v822 = vunpack.c.h.b16 %v204
    %v823 = vunpack.c.l.b16 %v205
    %v824 = vunpack.c.h.b16 %v205
    %v825 = vunpack.c.l.b16 %v206
    %v826 = vunpack.c.h.b16 %v206
    %v827 = vunpack.c.l.b16 %v207
    %v828 = vunpack.c.h.b16 %v207
    %v829 = vunpack.c.l.b16 %v208
    %v830 = vunpack.c.h.b16 %v208
    %v831 = vunpack.c.l.b16 %v209
    %v832 = vunpack.c.h.b16 %v209
    %v833 = vunpack.c.l.b16 %v210
    %v834 = vunpack.c.h.b16 %v210
    %v835 = vunpack.c.l.b16 %v211
    %v836 = vunpack.c.h.b16 %v211
    %v837 = vunpack.c.l.b16 %v212
    %v838 = vunpack.c.h.b16 %v212
    %v839 = vunpack.c.l.b16 %v213
    %v840 = vunpack.c.h.b16 %v213
    %v841 = vunpack.c.l.b16 %v214
    %v842 = vunpack.c.h.b16 %v214
    %v843 = vunpack.c.l.b16 %v215
    %v844 = vunpack.c.h.b16 %v215
    %v845 = vunpack.c.l.b16 %v216
    %v846 = vunpack.c.h.b16 %v216
    %v847 = vunpack.c.l.b16 %v217
    %v848 = vunpack.c.h.b16 %v217
    %v849 = vunpack.c.l.b16 %v218
    %v850 = vunpack.c.h.b16 %v218
    %v851 = vunpack.c.l.b16 %v219
    %v852 = vunpack.c.h.b16 %v219
    %v853 = vunpack.c.l.b16 %v220
    %v854 = vunpack.c.h.b16 %v220
    %v855 = vunpack.c.l.b16 %v221
    %v856 = vunpack.c.h.b16 %v221
    %v857 = vunpack.c.l.b16 %v222
    %v858 = vunpack.c.h.b16 %v222
    %v859 = vunpack.c.l.b16 %v223
    %v860 = vunpack.c.h.b16 %v223
    %v861 = vunpack.c.l.b16 %v224
    %v862 = vunpack.c.h.b16 %v224
    %v863 = vunpack.c.l.b16 %v225
    %v864 = vunpack.c.h.b16 %v225
    %v865 = vunpack.c.l.b16 %v226
    %v866 = vunpack.c.h.b16 %v226
    %v867 = vunpack.c.l.b16 %v227
    %v868 = vunpack.c.h.b16 %v227
    %v869 = vunpack.c.l.b16 %v228
    %v870 = vunpack.c.h.b16 %v228
    %v871 = vunpack.c.l.b16 %v229
    %v872 = vunpack.c.h.b16 %v229
    %v873 = vunpack.c.l.b16 %v230
    %v874 = vunpack.c.h.b16 %v230
    %v875 = vunpack.c.l.b16 %v231
    %v876 = vunpack.c.h.b16 %v231
    %v877 = vunpack.c.l.b16 %v232
    %v878 = vunpack.c.h.b16 %v232
    %v879 = vunpack.c.l.b16 %v233
    %v880 = vunpack.c.h.b16 %v233
    %v881 = vunpack.c.l.b16 %v234
    %v882 = vunpack.c.h.b16 %v234
    %v883 = vunpack.c.l.b16 %v235
    %v884 = vunpack.c.h.b16 %v235
    %v885 = vunpack.c.l.b16 %v236
    %v886 = vunpack.c.h.b16 %v236
    %v887 = vunpack.c.l.b16 %v237
    %v888 = vunpack.c.h.b16 %v237
    %v889 = vunpack.c.l.b16 %v238
    %v890 = vunpack.c.h.b16 %v238
    %v891 = vunpack.c.l.b16 %v239
    %v892 = vunpack.c.h.b16 %v239
    %v893 = vunpack.c.l.b16 %v240
    %v894 = vunpack.c.h.b16 %v240
    %v895 = vunpack.c.l.b16 %v241
    %v896 = vunpack.c.h.b16 %v241
    %v897 = vunpack.c.l.b16 %v242
    %v898 = vunpack.c.h.b16 %v242
    %v899 = vunpack.c.l.b16 %v243
    %v900 = vunpack.c.h.b16 %v243
    %v901 = vunpack.c.l.b16 %v244
    %v902 = vunpack.c.h.b16 %v244
    %v903 = vunpack.c.l.b16 %v245
    %v904 = vunpack.c.h.b16 %v245
    %v905 = vunpack.c.l.b16 %v246
    %v906 = vunpack.c.h.b16 %v246
    %v907 = vunpack.c.l.b16 %v247
    %v908 = vunpack.c.h.b16 %v247
    %v909 = vunpack.c.l.b16 %v248
    %v910 = vunpack.c.h.b16 %v248
    %v911 = vunpack.c.l.b16 %v249
    %v912 = vunpack.c.h.b16 %v249
    %v913 = vunpack.c.l.b16 %v250
    %v914 = vunpack.c.h.b16 %v250
    %v915 = vunpack.c.l.b16 %v251
    %v916 = vunpack.c.h.b16 %v251
    %v917 = vunpack.c.l.b16 %v252
    %v918 = vunpack.c.h.b16 %v252
    %v919 = vunpack.c.l.b16 %v253
    %v920 = vunpack.c.h.b16 %v253
    %v921 = vunpack.c.l.b16 %v254
    %v922 = vunpack.c.h.b16 %v254
    %v923 = vunpack.c.l.b16 %v255
    %v924 = vunpack.c.h.b16 %v255
    %v925 = vunpack.c.l.b16 %v256
    %v926 = vunpack.c.h.b16 %v256
    %v927 = vunpack.c.l.b16 %v257
    %v928 = vunpack.c.h.b16 %v257
    %v929 = vunpack.c.l.b16 %v258
    %v930 = vunpack.c.h.b16 %v258
    %v931 = vunpack.c.l.b16 %v259
    %v932 = vunpack.c.h.b16 %v259
    %v933 = vunpack.c.l.b16 %v260
    %v934 = vunpack.c.h.b16 %v260
    %v935 = vunpack.c.l.b16 %v261
    %v936 = vunpack.c.h.b16 %v261
    %v937 = vunpack.c.l.b16 %v262
    %v938 = vunpack.c.h.b16 %v262
    %v939 = vunpack.c.l.b16 %v263
    %v940 = vunpack.c.h.b16 %v263
    %v941 = vunpack.c.l.b16 %v264
    %v942 = vunpack.c.h.b16 %v264
    %v943 = vunpack.c.l.b16 %v265
    %v944 = vunpack.c.h.b16 %v265
    %v945 = vunpack.c.l.b16 %v266
    %v946 = vunpack.c.h.b16 %v266
    %v947 = vunpack.c.l.b16 %v267
    %v948 = vunpack.c.h.b16 %v267
    %v949 = vunpack.c.l.b16 %v268
    %v950 = vunpack.c.h.b16 %v268
    %v951 = vunpack.c.l.b16 %v269
    %v952 = vunpack.c.h.b16 %v269
    %v953 = vunpack.c.l.b16 %v270
    %v954 = vunpack.c.h.b16 %v270
    %v955 = vunpack.c.l.b16 %v271
    %v956 = vunpack.c.h.b16 %v271
    %v957 = vunpack.c.l.b16 %v272
    %v958 = vunpack.c.h.b16 %v272
    %v959 = vunpack.c.l.b16 %v273
    %v960 = vunpack.c.h.b16 %v273
    %v961 = vunpack.c.l.b16 %v274
    %v962 = vunpack.c.h.b16 %v274
    %v963 = vunpack.c.l.b16 %v275
    %v964 = vunpack.c.h.b16 %v275
    %v965 = vunpack.c.l.b16 %v276
    %v966 = vunpack.c.h.b16 %v276
    %v967 = vunpack.c.l.b16 %v277
    %v968 = vunpack.c.h.b16 %v277
    %v969 = vunpack.c.l.b16 %v278
    %v970 = vunpack.c.h.b16 %v278
    %v971 = vunpack.c.l.b16 %v279
    %v972 = vunpack.c.h.b16 %v279
    %v973 = vunpack.c.l.b16 %v280
    %v974 = vunpack.c.h.b16 %v280
    %v975 = vunpack.c.l.b16 %v281
    %v976 = vunpack.c.h.b16 %v281
    %v977 = vunpack.c.l.b16 %v282
    %v978 = vunpack.c.h.b16 %v282
    %v979 = vunpack.c.l.b16 %v283
    %v980 = vunpack.c.h.b16 %v283
    %v981 = vunpack.c.l.b16 %v284
    %v982 = vunpack.c.h.b16 %v284
    %v983 = vunpack.c.l.b16 %v285
    %v984 = vunpack.c.h.b16 %v285
    %v985 = vunpack.c.l.b16 %v286
    %v986 = vunpack.c.h.b16 %v286
    %v987 = vunpack.c.l.b16 %v287
    %v988 = vunpack.c.h.b16 %v287
    %v989 = vunpack.c.l.b16 %v288
    %v990 = vunpack.c.h.b16 %v288
    %v991 = vunpack.c.l.b16 %v289
    %v992 = vunpack.c.h.b16 %v289
    %v993 = vunpack.c.l.b16 %v290
    %v994 = vunpack.c.h.b16 %v290
    %v995 = vunpack.c.l.b16 %v291
    %v996 = vunpack.c.h.b16 %v291
    %v997 = vunpack.c.l.b16 %v292
    %v998 = vunpack.c.h.b16 %v292
    %v999 = vunpack.c.l.b16 %v293
    %v1000 = vunpack.c.h.b16 %v293
    %v1001 = vunpack.c.l.b16 %v294
    %v1002 = vunpack.c.h.b16 %v294
    %v1003 = vunpack.c.l.b16 %v295
    %v1004 = vunpack.c.h.b16 %v295
    %v1005 = vunpack.c.l.b16 %v296
    %v1006 = vunpack.c.h.b16 %v296
    %v1007 = vunpack.c.l.b16 %v297
    %v1008 = vunpack.c.h.b16 %v297
    %v1009 = vunpack.c.l.b16 %v298
    %v1010 = vunpack.c.h.b16 %v298
    %v1011 = vunpack.c.l.b16 %v299
    %v1012 = vunpack.c.h.b16 %v299
    %v1013 = vunpack.c.l.b16 %v300
    %v1014 = vunpack.c.h.b16 %v300
    %v1015 = vunpack.c.l.b16 %v301
    %v1016 = vunpack.c.h.b16 %v301
    %v1017 = vunpack.c.l.b16 %v302
    %v1018 = vunpack.c.h.b16 %v302
    %v1019 = vunpack.c.l.b16 %v303
    %v1020 = vunpack.c.h.b16 %v303
    %v1021 = vunpack.c.l.b16 %v304
    %v1022 = vunpack.c.h.b16 %v304
    %v1023 = vunpack.c.l.b16 %v305
    %v1024 = vunpack.c.h.b16 %v305
    %v1025 = vpack.c.b16 %v581, %v577
    %v1026 = vpack.c.b16 %v582, %v578
    %v1027 = vpack.c.b16 %v583, %v579
    %v1028 = vpack.c.b16 %v584, %v580
    %v1029 = vpack.c.b16 %v589, %v585
    %v1030 = vpack.c.b16 %v590, %v586
    %v1031 = vpack.c.b16 %v591, %v587
    %v1032 = vpack.c.b16 %v592, %v588
    %v1033 = vpack.c.b16 %v597, %v593
    %v1034 = vpack.c.b16 %v598, %v594
    %v1035 = vpack.c.b16 %v599, %v595
    %v1036 = vpack.c.b16 %v600, %v596
    %v1037 = vpack.c.b16 %v605, %v601
    %v1038 = vpack.c.b16 %v606, %v602
    %v1039 = vpack.c.b16 %v607, %v603
    %v1040 = vpack.c.b16 %v608, %v604
    %v1041 = vpack.c.b16 %v613, %v609
    %v1042 = vpack.c.b16 %v614, %v610
    %v1043 = vpack.c.b16 %v615, %v611
    %v1044 = vpack.c.b16 %v616, %v612
    %v1045 = vpack.c.b16 %v621, %v617
    %v1046 = vpack.c.b16 %v622, %v618
    %v1047 = vpack.c.b16 %v623, %v619
    %v1048 = vpack.c.b16 %v624, %v620
    %v1049 = vpack.c.b16 %v629, %v625
    %v1050 = vpack.c.b16 %v630, %v626
    %v1051 = vpack.c.b16 %v631, %v627
    %v1052 = vpack.c.b16 %v632, %v628
    %v1053 = vpack.c.b16 %v637, %v633
    %v1054 = vpack.c.b16 %v638, %v634
    %v1055 = vpack.c.b16 %v639, %v635
    %v1056 = vpack.c.b16 %v640, %v636
    %v1057 = vpack.c.b16 %v645, %v641
    %v1058 = vpack.c.b16 %v646, %v642
    %v1059 = vpack.c.b16 %v647, %v643
    %v1060 = vpack.c.b16 %v648, %v644
    %v1061 = vpack.c.b16 %v653, %v649
    %v1062 = vpack.c.b16 %v654, %v650
    %v1063 = vpack.c.b16 %v655, %v651
    %v1064 = vpack.c.b16 %v656, %v652
    %v1065 = vpack.c.b16 %v661, %v657
    %v1066 = vpack.c.b16 %v662, %v658
    %v1067 = vpack.c.b16 %v663, %v659
    %v1068 = vpack.c.b16 %v664, %v660
    %v1069 = vpack.c.b16 %v669, %v665
    %v1070 = vpack.c.b16 %v670, %v666
    %v1071 = vpack.c.b16 %v671, %v667
    %v1072 = vpack.c.b16 %v672, %v668
    %v1073 = vpack.c.b16 %v677, %v673
    %v1074 = vpack.c.b16 %v678, %v674
    %v1075 = vpack.c.b16 %v679, %v675
    %v1076 = vpack.c.b16 %v680, %v676
    %v1077 = vpack.c.b16 %v685, %v681
    %v1078 = vpack.c.b16 %v686, %v682
    %v1079 = vpack.c.b16 %v687, %v683
    %v1080 = vpack.c.b16 %v688, %v684
    %v1081 = vpack.c.b16 %v693, %v689
    %v1082 = vpack.c.b16 %v694, %v690
    %v1083 = vpack.c.b16 %v695, %v691
    %v1084 = vpack.c.b16 %v696, %v692
    %v1085 = vpack.c.b16 %v701, %v697
    %v1086 = vpack.c.b16 %v702, %v698
    %v1087 = vpack.c.b16 %v703, %v699
    %v1088 = vpack.c.b16 %v704, %v700
    %v1089 = vpack.c.b16 %v709, %v705
    %v1090 = vpack.c.b16 %v710, %v706
    %v1091 = vpack.c.b16 %v711, %v707
    %v1092 = vpack.c.b16 %v712, %v708
    %v1093 = vpack.c.b16 %v717, %v713
    %v1094 = vpack.c.b16 %v718, %v714
    %v1095 = vpack.c.b16 %v719, %v715
    %v1096 = vpack.c.b16 %v720, %v716
    %v1097 = vpack.c.b16 %v725, %v721
    %v1098 = vpack.c.b16 %v726, %v722
    %v1099 = vpack.c.b16 %v727, %v723
    %v1100 = vpack.c.b16 %v728, %v724
    %v1101 = vpack.c.b16 %v733, %v729
    %v1102 = vpack.c.b16 %v734, %v730
    %v1103 = vpack.c.b16 %v735, %v731
    %v1104 = vpack.c.b16 %v736, %v732
    %v1105 = vpack.c.b16 %v741, %v737
    %v1106 = vpack.c.b16 %v742, %v738
    %v1107 = vpack.c.b16 %v743, %v739
    %v1108 = vpack.c.b16 %v744, %v740
    %v1109 = vpack.c.b16 %v749, %v745
    %v1110 = vpack.c.b16 %v750, %v746
    %v1111 = vpack.c.b16 %v751, %v747
    %v1112 = vpack.c.b16 %v752, %v748
    %v1113 = vpack.c.b16 %v757, %v753
    %v1114 = vpack.c.b16 %v758, %v754
    %v1115 = vpack.c.b16 %v759, %v755
    %v1116 = vpack.c.b16 %v760, %v756
    %v1117 = vpack.c.b16 %v765, %v761
    %v1118 = vpack.c.b16 %v766, %v762
    %v1119 = vpack.c.b16 %v767, %v763
    %v1120 = vpack.c.b16 %v768, %v764
    %v1121 = vpack.c.b16 %v773, %v769
    %v1122 = vpack.c.b16 %v774, %v770
    %v1123 = vpack.c.b16 %v775, %v771
    %v1124 = vpack.c.b16 %v776, %v772
    %v1125 = vpack.c.b16 %v781, %v777
    %v1126 = vpack.c.b16 %v782, %v778
    %v1127 = vpack.c.b16 %v783, %v779
    %v1128 = vpack.c.b16 %v784, %v780
    %v1129 = vpack.c.b16 %v789, %v785
    %v1130 = vpack.c.b16 %v790, %v786
    %v1131 = vpack.c.b16 %v791, %v787
    %v1132 = vpack.c.b16 %v792, %v788
    %v1133 = vpack.c.b16 %v797, %v793
    %v1134 = vpack.c.b16 %v798, %v794
    %v1135 = vpack.c.b16 %v799, %v795
    %v1136 = vpack.c.b16 %v800, %v796
    %v1137 = vpack.c.b16 %v805, %v801
    %v1138 = vpack.c.b16 %v806, %v802
    %v1139 = vpack.c.b16 %v807, %v803
    %v1140 = vpack.c.b16 %v808, %v804
    %v1141 = vpack.c.b16 %v813, %v809
    %v1142 = vpack.c.b16 %v814, %v810
    %v1143 = vpack.c.b16 %v815, %v811
    %v1144 = vpack.c.b16 %v816, %v812
    %v1145 = vpack.c.b16 %v821, %v817
    %v1146 = vpack.c.b16 %v822, %v818
    %v1147 = vpack.c.b16 %v823, %v819
    %v1148 = vpack.c.b16 %v824, %v820
    %v1149 = vpack.c.b16 %v829, %v825
    %v1150 = vpack.c.b16 %v830, %v826
    %v1151 = vpack.c.b16 %v831, %v827
    %v1152 = vpack.c.b16 %v832, %v828
    %v1153 = vpack.c.b16 %v837, %v833
    %v1154 = vpack.c.b16 %v838, %v834
    %v1155 = vpack.c.b16 %v839, %v835
    %v1156 = vpack.c.b16 %v840, %v836
    %v1157 = vpack.c.b16 %v845, %v841
    %v1158 = vpack.c.b16 %v846, %v842
    %v1159 = vpack.c.b16 %v847, %v843
    %v1160 = vpack.c.b16 %v848, %v844
    %v1161 = vpack.c.b16 %v853, %v849
    %v1162 = vpack.c.b16 %v854, %v850
    %v1163 = vpack.c.b16 %v855, %v851
    %v1164 = vpack.c.b16 %v856, %v852
    %v1165 = vpack.c.b16 %v861, %v857
    %v1166 = vpack.c.b16 %v862, %v858
    %v1167 = vpack.c.b16 %v863, %v859
    %v1168 = vpack.c.b16 %v864, %v860
    %v1169 = vpack.c.b16 %v869, %v865
    %v1170 = vpack.c.b16 %v870, %v866
    %v1171 = vpack.c.b16 %v871, %v867
    %v1172 = vpack.c.b16 %v872, %v868
    %v1173 = vpack.c.b16 %v877, %v873
    %v1174 = vpack.c.b16 %v878, %v874
    %v1175 = vpack.c.b16 %v879, %v875
    %v1176 = vpack.c.b16 %v880, %v876
    %v1177 = vpack.c.b16 %v885, %v881
    %v1178 = vpack.c.b16 %v886, %v882
    %v1179 = vpack.c.b16 %v887, %v883
    %v1180 = vpack.c.b16 %v888, %v884
    %v1181 = vpack.c.b16 %v893, %v889
    %v1182 = vpack.c.b16 %v894, %v890
    %v1183 = vpack.c.b16 %v895, %v891
    %v1184 = vpack.c.b16 %v896, %v892
    %v1185 = vpack.c.b16 %v901, %v897
    %v1186 = vpack.c.b16 %v902, %v898
    %v1187 = vpack.c.b16 %v903, %v899
    %v1188 = vpack.c.b16 %v904, %v900
    %v1189 = vpack.c.b16 %v909, %v905
    %v1190 = vpack.c.b16 %v910, %v906
    %v1191 = vpack.c.b16 %v911, %v907
    %v1192 = vpack.c.b16 %v912, %v908
    %v1193 = vpack.c.b16 %v917, %v913
    %v1194 = vpack.c.b16 %v918, %v914
    %v1195 = vpack.c.b16 %v919, %v915
    %v1196 = vpack.c.b16 %v920, %v916
    %v1197 = vpack.c.b16 %v925, %v921
    %v1198 = vpack.c.b16 %v926, %v922
    %v1199 = vpack.c.b16 %v927, %v923
    %v1200 = vpack.c.b16 %v928, %v924
    %v1201 = vpack.c.b16 %v933, %v929
    %v1202 = vpack.c.b16 %v934, %v930
    %v1203 = vpack.c.b16 %v935, %v931
    %v1204 = vpack.c.b16 %v936, %v932
    %v1205 = vpack.c.b16 %v941, %v937
    %v1206 = vpack.c.b16 %v942, %v938
    %v1207 = vpack.c.b16 %v943, %v939
    %v1208 = vpack.c.b16 %v944, %v940
    %v1209 = vpack.c.b16 %v949, %v945
    %v1210 = vpack.c.b16 %v950, %v946
    %v1211 = vpack.c.b16 %v951, %v947
    %v1212 = vpack.c.b16 %v952, %v948
    %v1213 = vpack.c.b16 %v957, %v953
    %v1214 = vpack.c.b16 %v958, %v954
    %v1215 = vpack.c.b16 %v959, %v955
    %v1216 = vpack.c.b16 %v960, %v956
    %v1217 = vpack.c.b16 %v965, %v961
    %v1218 = vpack.c.b16 %v966, %v962
    %v1219 = vpack.c.b16 %v967, %v963
    %v1220 = vpack.c.b16 %v968, %v964
    %v1221 = vpack.c.b16 %v973, %v969
    %v1222 = vpack.c.b16 %v974, %v970
    %v1223 = vpack.c.b16 %v975, %v971
    %v1224 = vpack.c.b16 %v976, %v972
    %v1225 = vpack.c.b16 %v981, %v977
    %v1226 = vpack.c.b16 %v982, %v978
    %v1227 = vpack.c.b16 %v983, %v979
    %v1228 = vpack.c.b16 %v984, %v980
    %v1229 = vpack.c.b16 %v989, %v985
    %v1230 = vpack.c.b16 %v990, %v986
    %v1231 = vpack.c.b16 %v991, %v987
    %v1232 = vpack.c.b16 %v992, %v988
    %v1233 = vpack.c.b16 %v997, %v993
    %v1234 = vpack.c.b16 %v998, %v994
    %v1235 = vpack.c.b16 %v999, %v995
    %v1236 = vpack.c.b16 %v1000, %v996
    %v1237 = vpack.c.b16 %v1005, %v1001
    %v1238 = vpack.c.b16 %v1006, %v1002
    %v1239 = vpack.c.b16 %v1007, %v1003
    %v1240 = vpack.c.b16 %v1008, %v1004
    %v1241 = vpack.c.b16 %v1013, %v1009
    %v1242 = vpack.c.b16 %v1014, %v1010
    %v1243 = vpack.c.b16 %v1015, %v1011
    %v1244 = vpack.c.b16 %v1016, %v1012
    %v1245 = vpack.c.b16 %v1021, %v1017
    %v1246 = vpack.c.b16 %v1022, %v1018
    %v1247 = vpack.c.b16 %v1023, %v1019
    %v1248 = vpack.c.b16 %v1024, %v1020
    %1473 = vmatpush.bf16.msra.mxu0 %v1053
    %1474 = vmatpush.bf16.msra.mxu0 %v1049
    %1475 = vmatpush.bf16.msra.mxu0 %v1045
    %1476 = vmatpush.bf16.msra.mxu0 %v1041
    %1477 = vmatpush.bf16.msra.mxu0 %v1037
    %1478 = vmatpush.bf16.msra.mxu0 %v1033
    %1479 = vmatpush.bf16.msra.mxu0 %v1029
    %1480 = vmatpush.bf16.msra.mxu0 %v1025
    %1481 = vmatmul.bf16.gmra.mxu0 %v339
    %v1482 = vpop.f32.mrf.mxu0
    %v1483 = vadd.f32 %v308, %v1482
    %v1484 = vpop.f32.mrf.mxu0
    %v1485 = vadd.f32 %v308, %v1484
    %1486 = vdwg.mxu0
    %1487 = vmatpush.bf16.msra.mxu0 %v1085
    %1488 = vmatpush.bf16.msra.mxu0 %v1081
    %1489 = vmatpush.bf16.msra.mxu0 %v1077
    %1490 = vmatpush.bf16.msra.mxu0 %v1073
    %1491 = vmatpush.bf16.msra.mxu0 %v1069
    %1492 = vmatpush.bf16.msra.mxu0 %v1065
    %1493 = vmatpush.bf16.msra.mxu0 %v1061
    %1494 = vmatpush.bf16.msra.mxu0 %v1057
    %1495 = vmatmul.bf16.gmra.mxu0 %v340
    %v1496 = vpop.f32.mrf.mxu0
    %v1497 = vadd.f32 %v1483, %v1496
    %v1498 = vpop.f32.mrf.mxu0
    %v1499 = vadd.f32 %v1485, %v1498
    %1500 = vdwg.mxu0
    %1501 = vmatpush.bf16.msra.mxu0 %v1117
    %1502 = vmatpush.bf16.msra.mxu0 %v1113
    %1503 = vmatpush.bf16.msra.mxu0 %v1109
    %1504 = vmatpush.bf16.msra.mxu0 %v1105
    %1505 = vmatpush.bf16.msra.mxu0 %v1101
    %1506 = vmatpush.bf16.msra.mxu0 %v1097
    %1507 = vmatpush.bf16.msra.mxu0 %v1093
    %1508 = vmatpush.bf16.msra.mxu0 %v1089
    %1509 = vmatmul.bf16.gmra.mxu0 %v341
    %v1510 = vpop.f32.mrf.mxu0
    %v1511 = vadd.f32 %v1497, %v1510
    %v1512 = vpop.f32.mrf.mxu0
    %v1513 = vadd.f32 %v1499, %v1512
    %1514 = vdwg.mxu0
    %1515 = vmatpush.bf16.msra.mxu0 %v1149
    %1516 = vmatpush.bf16.msra.mxu0 %v1145
    %1517 = vmatpush.bf16.msra.mxu0 %v1141
    %1518 = vmatpush.bf16.msra.mxu0 %v1137
    %1519 = vmatpush.bf16.msra.mxu0 %v1133
    %1520 = vmatpush.bf16.msra.mxu0 %v1129
    %1521 = vmatpush.bf16.msra.mxu0 %v1125
    %1522 = vmatpush.bf16.msra.mxu0 %v1121
    %1523 = vmatmul.bf16.gmra.mxu0 %v342
    %v1524 = vpop.f32.mrf.mxu0
    %v1525 = vadd.f32 %v1511, %v1524
    %v1526 = vpop.f32.mrf.mxu0
    %v1527 = vadd.f32 %v1513, %v1526
    %1528 = vdwg.mxu0
    %1529 = vmatpush.bf16.msra.mxu0 %v1181
    %1530 = vmatpush.bf16.msra.mxu0 %v1177
    %1531 = vmatpush.bf16.msra.mxu0 %v1173
    %1532 = vmatpush.bf16.msra.mxu0 %v1169
    %1533 = vmatpush.bf16.msra.mxu0 %v1165
    %1534 = vmatpush.bf16.msra.mxu0 %v1161
    %1535 = vmatpush.bf16.msra.mxu0 %v1157
    %1536 = vmatpush.bf16.msra.mxu0 %v1153
    %1537 = vmatmul.bf16.gmra.mxu0 %v343
    %v1538 = vpop.f32.mrf.mxu0
    %v1539 = vadd.f32 %v1525, %v1538
    %v1540 = vpop.f32.mrf.mxu0
    %v1541 = vadd.f32 %v1527, %v1540
    %1542 = vdwg.mxu0
    %1543 = vmatpush.bf16.msra.mxu0 %v1213
    %1544 = vmatpush.bf16.msra.mxu0 %v1209
    %1545 = vmatpush.bf16.msra.mxu0 %v1205
    %1546 = vmatpush.bf16.msra.mxu0 %v1201
    %1547 = vmatpush.bf16.msra.mxu0 %v1197
    %1548 = vmatpush.bf16.msra.mxu0 %v1193
    %1549 = vmatpush.bf16.msra.mxu0 %v1189
    %1550 = vmatpush.bf16.msra.mxu0 %v1185
    %1551 = vmatmul.bf16.gmra.mxu0 %v344
    %v1552 = vpop.f32.mrf.mxu0
    %v1553 = vadd.f32 %v1539, %v1552
    %v1554 = vpop.f32.mrf.mxu0
    %v1555 = vadd.f32 %v1541, %v1554
    %1556 = vdwg.mxu0
    %1557 = vmatpush.bf16.msra.mxu0 %v1245
    %1558 = vmatpush.bf16.msra.mxu0 %v1241
    %1559 = vmatpush.bf16.msra.mxu0 %v1237
    %1560 = vmatpush.bf16.msra.mxu0 %v1233
    %1561 = vmatpush.bf16.msra.mxu0 %v1229
    %1562 = vmatpush.bf16.msra.mxu0 %v1225
    %1563 = vmatpush.bf16.msra.mxu0 %v1221
    %1564 = vmatpush.bf16.msra.mxu0 %v1217
    %1565 = vmatmul.bf16.gmra.mxu0 %v345
    %v1566 = vpop.f32.mrf.mxu0
    %v1567 = vadd.f32 %v1553, %v1566
    %v1568 = vpop.f32.mrf.mxu0
    %v1569 = vadd.f32 %v1555, %v1568
    %1570 = vdwg.mxu0
    %1571 = vmatpush.bf16.msra.mxu0 %v1054
    %1572 = vmatpush.bf16.msra.mxu0 %v1050
    %1573 = vmatpush.bf16.msra.mxu0 %v1046
    %1574 = vmatpush.bf16.msra.mxu0 %v1042
    %1575 = vmatpush.bf16.msra.mxu0 %v1038
    %1576 = vmatpush.bf16.msra.mxu0 %v1034
    %1577 = vmatpush.bf16.msra.mxu0 %v1030
    %1578 = vmatpush.bf16.msra.mxu0 %v1026
    %1579 = vmatmul.bf16.gmra.mxu0 %v339
    %v1580 = vpop.f32.mrf.mxu0
    %v1581 = vadd.f32 %v309, %v1580
    %v1582 = vpop.f32.mrf.mxu0
    %v1583 = vadd.f32 %v309, %v1582
    %1584 = vdwg.mxu0
    %1585 = vmatpush.bf16.msra.mxu0 %v1086
    %1586 = vmatpush.bf16.msra.mxu0 %v1082
    %1587 = vmatpush.bf16.msra.mxu0 %v1078
    %1588 = vmatpush.bf16.msra.mxu0 %v1074
    %1589 = vmatpush.bf16.msra.mxu0 %v1070
    %1590 = vmatpush.bf16.msra.mxu0 %v1066
    %1591 = vmatpush.bf16.msra.mxu0 %v1062
    %1592 = vmatpush.bf16.msra.mxu0 %v1058
    %1593 = vmatmul.bf16.gmra.mxu0 %v340
    %v1594 = vpop.f32.mrf.mxu0
    %v1595 = vadd.f32 %v1581, %v1594
    %v1596 = vpop.f32.mrf.mxu0
    %v1597 = vadd.f32 %v1583, %v1596
    %1598 = vdwg.mxu0
    %1599 = vmatpush.bf16.msra.mxu0 %v1118
    %1600 = vmatpush.bf16.msra.mxu0 %v1114
    %1601 = vmatpush.bf16.msra.mxu0 %v1110
    %1602 = vmatpush.bf16.msra.mxu0 %v1106
    %1603 = vmatpush.bf16.msra.mxu0 %v1102
    %1604 = vmatpush.bf16.msra.mxu0 %v1098
    %1605 = vmatpush.bf16.msra.mxu0 %v1094
    %1606 = vmatpush.bf16.msra.mxu0 %v1090
    %1607 = vmatmul.bf16.gmra.mxu0 %v341
    %v1608 = vpop.f32.mrf.mxu0
    %v1609 = vadd.f32 %v1595, %v1608
    %v1610 = vpop.f32.mrf.mxu0
    %v1611 = vadd.f32 %v1597, %v1610
    %1612 = vdwg.mxu0
    %1613 = vmatpush.bf16.msra.mxu0 %v1150
    %1614 = vmatpush.bf16.msra.mxu0 %v1146
    %1615 = vmatpush.bf16.msra.mxu0 %v1142
    %1616 = vmatpush.bf16.msra.mxu0 %v1138
    %1617 = vmatpush.bf16.msra.mxu0 %v1134
    %1618 = vmatpush.bf16.msra.mxu0 %v1130
    %1619 = vmatpush.bf16.msra.mxu0 %v1126
    %1620 = vmatpush.bf16.msra.mxu0 %v1122
    %1621 = vmatmul.bf16.gmra.mxu0 %v342
    %v1622 = vpop.f32.mrf.mxu0
    %v1623 = vadd.f32 %v1609, %v1622
    %v1624 = vpop.f32.mrf.mxu0
    %v1625 = vadd.f32 %v1611, %v1624
    %1626 = vdwg.mxu0
    %1627 = vmatpush.bf16.msra.mxu0 %v1182
    %1628 = vmatpush.bf16.msra.mxu0 %v1178
    %1629 = vmatpush.bf16.msra.mxu0 %v1174
    %1630 = vmatpush.bf16.msra.mxu0 %v1170
    %1631 = vmatpush.bf16.msra.mxu0 %v1166
    %1632 = vmatpush.bf16.msra.mxu0 %v1162
    %1633 = vmatpush.bf16.msra.mxu0 %v1158
    %1634 = vmatpush.bf16.msra.mxu0 %v1154
    %1635 = vmatmul.bf16.gmra.mxu0 %v343
    %v1636 = vpop.f32.mrf.mxu0
    %v1637 = vadd.f32 %v1623, %v1636
    %v1638 = vpop.f32.mrf.mxu0
    %v1639 = vadd.f32 %v1625, %v1638
    %1640 = vdwg.mxu0
    %1641 = vmatpush.bf16.msra.mxu0 %v1214
    %1642 = vmatpush.bf16.msra.mxu0 %v1210
    %1643 = vmatpush.bf16.msra.mxu0 %v1206
    %1644 = vmatpush.bf16.msra.mxu0 %v1202
    %1645 = vmatpush.bf16.msra.mxu0 %v1198
    %1646 = vmatpush.bf16.msra.mxu0 %v1194
    %1647 = vmatpush.bf16.msra.mxu0 %v1190
    %1648 = vmatpush.bf16.msra.mxu0 %v1186
    %1649 = vmatmul.bf16.gmra.mxu0 %v344
    %v1650 = vpop.f32.mrf.mxu0
    %v1651 = vadd.f32 %v1637, %v1650
    %v1652 = vpop.f32.mrf.mxu0
    %v1653 = vadd.f32 %v1639, %v1652
    %1654 = vdwg.mxu0
    %1655 = vmatpush.bf16.msra.mxu0 %v1246
    %1656 = vmatpush.bf16.msra.mxu0 %v1242
    %1657 = vmatpush.bf16.msra.mxu0 %v1238
    %1658 = vmatpush.bf16.msra.mxu0 %v1234
    %1659 = vmatpush.bf16.msra.mxu0 %v1230
    %1660 = vmatpush.bf16.msra.mxu0 %v1226
    %1661 = vmatpush.bf16.msra.mxu0 %v1222
    %1662 = vmatpush.bf16.msra.mxu0 %v1218
    %1663 = vmatmul.bf16.gmra.mxu0 %v345
    %v1664 = vpop.f32.mrf.mxu0
    %v1665 = vadd.f32 %v1651, %v1664
    %v1666 = vpop.f32.mrf.mxu0
    %v1667 = vadd.f32 %v1653, %v1666
    %1668 = vdwg.mxu0
    %1669 = vmatpush.bf16.msra.mxu0 %v1055
    %1670 = vmatpush.bf16.msra.mxu0 %v1051
    %1671 = vmatpush.bf16.msra.mxu0 %v1047
    %1672 = vmatpush.bf16.msra.mxu0 %v1043
    %1673 = vmatpush.bf16.msra.mxu0 %v1039
    %1674 = vmatpush.bf16.msra.mxu0 %v1035
    %1675 = vmatpush.bf16.msra.mxu0 %v1031
    %1676 = vmatpush.bf16.msra.mxu0 %v1027
    %1677 = vmatmul.bf16.gmra.mxu0 %v339
    %v1678 = vpop.f32.mrf.mxu0
    %v1679 = vadd.f32 %v310, %v1678
    %v1680 = vpop.f32.mrf.mxu0
    %v1681 = vadd.f32 %v310, %v1680
    %1682 = vdwg.mxu0
    %1683 = vmatpush.bf16.msra.mxu0 %v1087
    %1684 = vmatpush.bf16.msra.mxu0 %v1083
    %1685 = vmatpush.bf16.msra.mxu0 %v1079
    %1686 = vmatpush.bf16.msra.mxu0 %v1075
    %1687 = vmatpush.bf16.msra.mxu0 %v1071
    %1688 = vmatpush.bf16.msra.mxu0 %v1067
    %1689 = vmatpush.bf16.msra.mxu0 %v1063
    %1690 = vmatpush.bf16.msra.mxu0 %v1059
    %1691 = vmatmul.bf16.gmra.mxu0 %v340
    %v1692 = vpop.f32.mrf.mxu0
    %v1693 = vadd.f32 %v1679, %v1692
    %v1694 = vpop.f32.mrf.mxu0
    %v1695 = vadd.f32 %v1681, %v1694
    %1696 = vdwg.mxu0
    %1697 = vmatpush.bf16.msra.mxu0 %v1119
    %1698 = vmatpush.bf16.msra.mxu0 %v1115
    %1699 = vmatpush.bf16.msra.mxu0 %v1111
    %1700 = vmatpush.bf16.msra.mxu0 %v1107
    %1701 = vmatpush.bf16.msra.mxu0 %v1103
    %1702 = vmatpush.bf16.msra.mxu0 %v1099
    %1703 = vmatpush.bf16.msra.mxu0 %v1095
    %1704 = vmatpush.bf16.msra.mxu0 %v1091
    %1705 = vmatmul.bf16.gmra.mxu0 %v341
    %v1706 = vpop.f32.mrf.mxu0
    %v1707 = vadd.f32 %v1693, %v1706
    %v1708 = vpop.f32.mrf.mxu0
    %v1709 = vadd.f32 %v1695, %v1708
    %1710 = vdwg.mxu0
    %1711 = vmatpush.bf16.msra.mxu0 %v1151
    %1712 = vmatpush.bf16.msra.mxu0 %v1147
    %1713 = vmatpush.bf16.msra.mxu0 %v1143
    %1714 = vmatpush.bf16.msra.mxu0 %v1139
    %1715 = vmatpush.bf16.msra.mxu0 %v1135
    %1716 = vmatpush.bf16.msra.mxu0 %v1131
    %1717 = vmatpush.bf16.msra.mxu0 %v1127
    %1718 = vmatpush.bf16.msra.mxu0 %v1123
    %1719 = vmatmul.bf16.gmra.mxu0 %v342
    %v1720 = vpop.f32.mrf.mxu0
    %v1721 = vadd.f32 %v1707, %v1720
    %v1722 = vpop.f32.mrf.mxu0
    %v1723 = vadd.f32 %v1709, %v1722
    %1724 = vdwg.mxu0
    %1725 = vmatpush.bf16.msra.mxu0 %v1183
    %1726 = vmatpush.bf16.msra.mxu0 %v1179
    %1727 = vmatpush.bf16.msra.mxu0 %v1175
    %1728 = vmatpush.bf16.msra.mxu0 %v1171
    %1729 = vmatpush.bf16.msra.mxu0 %v1167
    %1730 = vmatpush.bf16.msra.mxu0 %v1163
    %1731 = vmatpush.bf16.msra.mxu0 %v1159
    %1732 = vmatpush.bf16.msra.mxu0 %v1155
    %1733 = vmatmul.bf16.gmra.mxu0 %v343
    %v1734 = vpop.f32.mrf.mxu0
    %v1735 = vadd.f32 %v1721, %v1734
    %v1736 = vpop.f32.mrf.mxu0
    %v1737 = vadd.f32 %v1723, %v1736
    %1738 = vdwg.mxu0
    %1739 = vmatpush.bf16.msra.mxu0 %v1215
    %1740 = vmatpush.bf16.msra.mxu0 %v1211
    %1741 = vmatpush.bf16.msra.mxu0 %v1207
    %1742 = vmatpush.bf16.msra.mxu0 %v1203
    %1743 = vmatpush.bf16.msra.mxu0 %v1199
    %1744 = vmatpush.bf16.msra.mxu0 %v1195
    %1745 = vmatpush.bf16.msra.mxu0 %v1191
    %1746 = vmatpush.bf16.msra.mxu0 %v1187
    %1747 = vmatmul.bf16.gmra.mxu0 %v344
    %v1748 = vpop.f32.mrf.mxu0
    %v1749 = vadd.f32 %v1735, %v1748
    %v1750 = vpop.f32.mrf.mxu0
    %v1751 = vadd.f32 %v1737, %v1750
    %1752 = vdwg.mxu0
    %1753 = vmatpush.bf16.msra.mxu0 %v1247
    %1754 = vmatpush.bf16.msra.mxu0 %v1243
    %1755 = vmatpush.bf16.msra.mxu0 %v1239
    %1756 = vmatpush.bf16.msra.mxu0 %v1235
    %1757 = vmatpush.bf16.msra.mxu0 %v1231
    %1758 = vmatpush.bf16.msra.mxu0 %v1227
    %1759 = vmatpush.bf16.msra.mxu0 %v1223
    %1760 = vmatpush.bf16.msra.mxu0 %v1219
    %1761 = vmatmul.bf16.gmra.mxu0 %v345
    %v1762 = vpop.f32.mrf.mxu0
    %v1763 = vadd.f32 %v1749, %v1762
    %v1764 = vpop.f32.mrf.mxu0
    %v1765 = vadd.f32 %v1751, %v1764
    %1766 = vdwg.mxu0
    %1767 = vmatpush.bf16.msra.mxu0 %v1056
    %1768 = vmatpush.bf16.msra.mxu0 %v1052
    %1769 = vmatpush.bf16.msra.mxu0 %v1048
    %1770 = vmatpush.bf16.msra.mxu0 %v1044
    %1771 = vmatpush.bf16.msra.mxu0 %v1040
    %1772 = vmatpush.bf16.msra.mxu0 %v1036
    %1773 = vmatpush.bf16.msra.mxu0 %v1032
    %1774 = vmatpush.bf16.msra.mxu0 %v1028
    %1775 = vmatmul.bf16.gmra.mxu0 %v339
    %v1776 = vpop.f32.mrf.mxu0
    %v1777 = vadd.f32 %v311, %v1776
    %v1778 = vpop.f32.mrf.mxu0
    %v1779 = vadd.f32 %v311, %v1778
    %1780 = vdwg.mxu0
    %1781 = vmatpush.bf16.msra.mxu0 %v1088
    %1782 = vmatpush.bf16.msra.mxu0 %v1084
    %1783 = vmatpush.bf16.msra.mxu0 %v1080
    %1784 = vmatpush.bf16.msra.mxu0 %v1076
    %1785 = vmatpush.bf16.msra.mxu0 %v1072
    %1786 = vmatpush.bf16.msra.mxu0 %v1068
    %1787 = vmatpush.bf16.msra.mxu0 %v1064
    %1788 = vmatpush.bf16.msra.mxu0 %v1060
    %1789 = vmatmul.bf16.gmra.mxu0 %v340
    %v1790 = vpop.f32.mrf.mxu0
    %v1791 = vadd.f32 %v1777, %v1790
    %v1792 = vpop.f32.mrf.mxu0
    %v1793 = vadd.f32 %v1779, %v1792
    %1794 = vdwg.mxu0
    %1795 = vmatpush.bf16.msra.mxu0 %v1120
    %1796 = vmatpush.bf16.msra.mxu0 %v1116
    %1797 = vmatpush.bf16.msra.mxu0 %v1112
    %1798 = vmatpush.bf16.msra.mxu0 %v1108
    %1799 = vmatpush.bf16.msra.mxu0 %v1104
    %1800 = vmatpush.bf16.msra.mxu0 %v1100
    %1801 = vmatpush.bf16.msra.mxu0 %v1096
    %1802 = vmatpush.bf16.msra.mxu0 %v1092
    %1803 = vmatmul.bf16.gmra.mxu0 %v341
    %v1804 = vpop.f32.mrf.mxu0
    %v1805 = vadd.f32 %v1791, %v1804
    %v1806 = vpop.f32.mrf.mxu0
    %v1807 = vadd.f32 %v1793, %v1806
    %1808 = vdwg.mxu0
    %1809 = vmatpush.bf16.msra.mxu0 %v1152
    %1810 = vmatpush.bf16.msra.mxu0 %v1148
    %1811 = vmatpush.bf16.msra.mxu0 %v1144
    %1812 = vmatpush.bf16.msra.mxu0 %v1140
    %1813 = vmatpush.bf16.msra.mxu0 %v1136
    %1814 = vmatpush.bf16.msra.mxu0 %v1132
    %1815 = vmatpush.bf16.msra.mxu0 %v1128
    %1816 = vmatpush.bf16.msra.mxu0 %v1124
    %1817 = vmatmul.bf16.gmra.mxu0 %v342
    %v1818 = vpop.f32.mrf.mxu0
    %v1819 = vadd.f32 %v1805, %v1818
    %v1820 = vpop.f32.mrf.mxu0
    %v1821 = vadd.f32 %v1807, %v1820
    %1822 = vdwg.mxu0
    %1823 = vmatpush.bf16.msra.mxu0 %v1184
    %1824 = vmatpush.bf16.msra.mxu0 %v1180
    %1825 = vmatpush.bf16.msra.mxu0 %v1176
    %1826 = vmatpush.bf16.msra.mxu0 %v1172
    %1827 = vmatpush.bf16.msra.mxu0 %v1168
    %1828 = vmatpush.bf16.msra.mxu0 %v1164
    %1829 = vmatpush.bf16.msra.mxu0 %v1160
    %1830 = vmatpush.bf16.msra.mxu0 %v1156
    %1831 = vmatmul.bf16.gmra.mxu0 %v343
    %v1832 = vpop.f32.mrf.mxu0
    %v1833 = vadd.f32 %v1819, %v1832
    %v1834 = vpop.f32.mrf.mxu0
    %v1835 = vadd.f32 %v1821, %v1834
    %1836 = vdwg.mxu0
    %1837 = vmatpush.bf16.msra.mxu0 %v1216
    %1838 = vmatpush.bf16.msra.mxu0 %v1212
    %1839 = vmatpush.bf16.msra.mxu0 %v1208
    %1840 = vmatpush.bf16.msra.mxu0 %v1204
    %1841 = vmatpush.bf16.msra.mxu0 %v1200
    %1842 = vmatpush.bf16.msra.mxu0 %v1196
    %1843 = vmatpush.bf16.msra.mxu0 %v1192
    %1844 = vmatpush.bf16.msra.mxu0 %v1188
    %1845 = vmatmul.bf16.gmra.mxu0 %v344
    %v1846 = vpop.f32.mrf.mxu0
    %v1847 = vadd.f32 %v1833, %v1846
    %v1848 = vpop.f32.mrf.mxu0
    %v1849 = vadd.f32 %v1835, %v1848
    %1850 = vdwg.mxu0
    %1851 = vmatpush.bf16.msra.mxu0 %v1248
    %1852 = vmatpush.bf16.msra.mxu0 %v1244
    %1853 = vmatpush.bf16.msra.mxu0 %v1240
    %1854 = vmatpush.bf16.msra.mxu0 %v1236
    %1855 = vmatpush.bf16.msra.mxu0 %v1232
    %1856 = vmatpush.bf16.msra.mxu0 %v1228
    %1857 = vmatpush.bf16.msra.mxu0 %v1224
    %1858 = vmatpush.bf16.msra.mxu0 %v1220
    %1859 = vmatmul.bf16.gmra.mxu0 %v345
    %v1860 = vpop.f32.mrf.mxu0
    %v1861 = vadd.f32 %v1847, %v1860
    %v1862 = vpop.f32.mrf.mxu0
    %v1863 = vadd.f32 %v1849, %v1862
    %1864 = vdwg.mxu0
    %v1865 = vmax.f32 %v1567, 0.0
    %v1866 = vmax.f32 %v1665, 0.0
    %v1867 = vmax.f32 %v1763, 0.0
    %v1868 = vmax.f32 %v1861, 0.0
    %v1869 = vmax.f32 %v1569, 0.0
    %v1870 = vmax.f32 %v1667, 0.0
    %v1871 = vmax.f32 %v1765, 0.0
    %v1872 = vmax.f32 %v1863, 0.0
    %v1873 = vpack.c.bf16 %v1869, %v1865
    %v1874 = vpack.c.bf16 %v1870, %v1866
    %v1875 = vpack.c.bf16 %v1871, %v1867
    %v1876 = vpack.c.bf16 %v1872, %v1868
    %v1877 = vld [vmem:[#allocation5] sm:$0xff]
    %v1878 = vld [vmem:[#allocation5 + $0x8] sm:$0xff]
    %v1879 = vld [vmem:[#allocation5 + $0x10] sm:$0xff]
    %v1880 = vld [vmem:[#allocation5 + $0x18] sm:$0xff]
    %v1881 = vld [vmem:[#allocation5 + $0x20] sm:$0xff]
    %v1882 = vld [vmem:[#allocation5 + $0x28] sm:$0xff]
    %v1883 = vld [vmem:[#allocation5 + $0x30] sm:$0xff]
    %v1884 = vld [vmem:[#allocation5 + $0x38] sm:$0xff]
    %v1885 = vld [vmem:[#allocation5 + $0x40] sm:$0xff]
    %v1886 = vld [vmem:[#allocation5 + $0x48] sm:$0xff]
    %v1887 = vld [vmem:[#allocation5 + $0x50] sm:$0xff]
    %v1888 = vld [vmem:[#allocation5 + $0x58] sm:$0xff]
    %v1889 = vld [vmem:[#allocation5 + $0x60] sm:$0xff]
    %v1890 = vld [vmem:[#allocation5 + $0x68] sm:$0xff]
    %v1891 = vld [vmem:[#allocation5 + $0x70] sm:$0xff]
    %v1892 = vld [vmem:[#allocation5 + $0x78] sm:$0xff]
    %v1893 = vld [vmem:[#allocation5 + $0x80] sm:$0xff]
    %v1894 = vld [vmem:[#allocation5 + $0x88] sm:$0xff]
    %v1895 = vld [vmem:[#allocation5 + $0x90] sm:$0xff]
    %v1896 = vld [vmem:[#allocation5 + $0x98] sm:$0xff]
    %v1897 = vld [vmem:[#allocation5 + $0xa0] sm:$0xff]
    %v1898 = vld [vmem:[#allocation5 + $0xa8] sm:$0xff]
    %v1899 = vld [vmem:[#allocation5 + $0xb0] sm:$0xff]
    %v1900 = vld [vmem:[#allocation5 + $0xb8] sm:$0xff]
    %v1901 = vld [vmem:[#allocation5 + $0xc0] sm:$0xff]
    %v1902 = vld [vmem:[#allocation5 + $0xc8] sm:$0xff]
    %v1903 = vld [vmem:[#allocation5 + $0xd0] sm:$0xff]
    %v1904 = vld [vmem:[#allocation5 + $0xd8] sm:$0xff]
    %v1905 = vld [vmem:[#allocation5 + $0xe0] sm:$0xff]
    %v1906 = vld [vmem:[#allocation5 + $0xe8] sm:$0xff]
    %v1907 = vld [vmem:[#allocation5 + $0xf0] sm:$0xff]
    %v1908 = vld [vmem:[#allocation5 + $0xf8] sm:$0xff]
    %v1909 = vld [vmem:[#allocation5 + $0x100] sm:$0xff]
    %v1910 = vld [vmem:[#allocation5 + $0x108] sm:$0xff]
    %v1911 = vld [vmem:[#allocation5 + $0x110] sm:$0xff]
    %v1912 = vld [vmem:[#allocation5 + $0x118] sm:$0xff]
    %v1913 = vld [vmem:[#allocation5 + $0x120] sm:$0xff]
    %v1914 = vld [vmem:[#allocation5 + $0x128] sm:$0xff]
    %v1915 = vld [vmem:[#allocation5 + $0x130] sm:$0xff]
    %v1916 = vld [vmem:[#allocation5 + $0x138] sm:$0xff]
    %v1917 = vld [vmem:[#allocation5 + $0x140] sm:$0xff]
    %v1918 = vld [vmem:[#allocation5 + $0x148] sm:$0xff]
    %v1919 = vld [vmem:[#allocation5 + $0x150] sm:$0xff]
    %v1920 = vld [vmem:[#allocation5 + $0x158] sm:$0xff]
    %v1921 = vld [vmem:[#allocation5 + $0x160] sm:$0xff]
    %v1922 = vld [vmem:[#allocation5 + $0x168] sm:$0xff]
    %v1923 = vld [vmem:[#allocation5 + $0x170] sm:$0xff]
    %v1924 = vld [vmem:[#allocation5 + $0x178] sm:$0xff]
    %v1925 = vld [vmem:[#allocation5 + $0x180] sm:$0xff]
    %v1926 = vld [vmem:[#allocation5 + $0x188] sm:$0xff]
    %v1927 = vld [vmem:[#allocation5 + $0x190] sm:$0xff]
    %v1928 = vld [vmem:[#allocation5 + $0x198] sm:$0xff]
    %v1929 = vld [vmem:[#allocation5 + $0x1a0] sm:$0xff]
    %v1930 = vld [vmem:[#allocation5 + $0x1a8] sm:$0xff]
    %v1931 = vld [vmem:[#allocation5 + $0x1b0] sm:$0xff]
    %v1932 = vld [vmem:[#allocation5 + $0x1b8] sm:$0xff]
    %v1933 = vld [vmem:[#allocation5 + $0x1c0] sm:$0xff]
    %v1934 = vld [vmem:[#allocation5 + $0x1c8] sm:$0xff]
    %v1935 = vld [vmem:[#allocation5 + $0x1d0] sm:$0xff]
    %v1936 = vld [vmem:[#allocation5 + $0x1d8] sm:$0xff]
    %v1937 = vld [vmem:[#allocation5 + $0x1e0] sm:$0xff]
    %v1938 = vld [vmem:[#allocation5 + $0x1e8] sm:$0xff]
    %v1939 = vld [vmem:[#allocation5 + $0x1f0] sm:$0xff]
    %v1940 = vld [vmem:[#allocation5 + $0x1f8] sm:$0xff]
    %v1941 = vld [vmem:[#allocation5 + $0x200] sm:$0xff]
    %v1942 = vld [vmem:[#allocation5 + $0x208] sm:$0xff]
    %v1943 = vld [vmem:[#allocation5 + $0x210] sm:$0xff]
    %v1944 = vld [vmem:[#allocation5 + $0x218] sm:$0xff]
    %v1945 = vld [vmem:[#allocation5 + $0x220] sm:$0xff]
    %v1946 = vld [vmem:[#allocation5 + $0x228] sm:$0xff]
    %v1947 = vld [vmem:[#allocation5 + $0x230] sm:$0xff]
    %v1948 = vld [vmem:[#allocation5 + $0x238] sm:$0xff]
    %v1949 = vld [vmem:[#allocation5 + $0x240] sm:$0xff]
    %v1950 = vld [vmem:[#allocation5 + $0x248] sm:$0xff]
    %v1951 = vld [vmem:[#allocation5 + $0x250] sm:$0xff]
    %v1952 = vld [vmem:[#allocation5 + $0x258] sm:$0xff]
    %v1953 = vld [vmem:[#allocation5 + $0x260] sm:$0xff]
    %v1954 = vld [vmem:[#allocation5 + $0x268] sm:$0xff]
    %v1955 = vld [vmem:[#allocation5 + $0x270] sm:$0xff]
    %v1956 = vld [vmem:[#allocation5 + $0x278] sm:$0xff]
    %v1957 = vld [vmem:[#allocation5 + $0x280] sm:$0xff]
    %v1958 = vld [vmem:[#allocation5 + $0x288] sm:$0xff]
    %v1959 = vld [vmem:[#allocation5 + $0x290] sm:$0xff]
    %v1960 = vld [vmem:[#allocation5 + $0x298] sm:$0xff]
    %v1961 = vld [vmem:[#allocation5 + $0x2a0] sm:$0xff]
    %v1962 = vld [vmem:[#allocation5 + $0x2a8] sm:$0xff]
    %v1963 = vld [vmem:[#allocation5 + $0x2b0] sm:$0xff]
    %v1964 = vld [vmem:[#allocation5 + $0x2b8] sm:$0xff]
    %v1965 = vld [vmem:[#allocation5 + $0x2c0] sm:$0xff]
    %v1966 = vld [vmem:[#allocation5 + $0x2c8] sm:$0xff]
    %v1967 = vld [vmem:[#allocation5 + $0x2d0] sm:$0xff]
    %v1968 = vld [vmem:[#allocation5 + $0x2d8] sm:$0xff]
    %v1969 = vld [vmem:[#allocation5 + $0x2e0] sm:$0xff]
    %v1970 = vld [vmem:[#allocation5 + $0x2e8] sm:$0xff]
    %v1971 = vld [vmem:[#allocation5 + $0x2f0] sm:$0xff]
    %v1972 = vld [vmem:[#allocation5 + $0x2f8] sm:$0xff]
    %v1973 = vld [vmem:[#allocation5 + $0x300] sm:$0xff]
    %v1974 = vld [vmem:[#allocation5 + $0x308] sm:$0xff]
    %v1975 = vld [vmem:[#allocation5 + $0x310] sm:$0xff]
    %v1976 = vld [vmem:[#allocation5 + $0x318] sm:$0xff]
    %v1977 = vld [vmem:[#allocation5 + $0x320] sm:$0xff]
    %v1978 = vld [vmem:[#allocation5 + $0x328] sm:$0xff]
    %v1979 = vld [vmem:[#allocation5 + $0x330] sm:$0xff]
    %v1980 = vld [vmem:[#allocation5 + $0x338] sm:$0xff]
    %v1981 = vld [vmem:[#allocation5 + $0x340] sm:$0xff]
    %v1982 = vld [vmem:[#allocation5 + $0x348] sm:$0xff]
    %v1983 = vld [vmem:[#allocation5 + $0x350] sm:$0xff]
    %v1984 = vld [vmem:[#allocation5 + $0x358] sm:$0xff]
    %v1985 = vld [vmem:[#allocation5 + $0x360] sm:$0xff]
    %v1986 = vld [vmem:[#allocation5 + $0x368] sm:$0xff]
    %v1987 = vld [vmem:[#allocation5 + $0x370] sm:$0xff]
    %v1988 = vld [vmem:[#allocation5 + $0x378] sm:$0xff]
    %v1989 = vld [vmem:[#allocation5 + $0x380] sm:$0xff]
    %v1990 = vld [vmem:[#allocation5 + $0x388] sm:$0xff]
    %v1991 = vld [vmem:[#allocation5 + $0x390] sm:$0xff]
    %v1992 = vld [vmem:[#allocation5 + $0x398] sm:$0xff]
    %v1993 = vld [vmem:[#allocation5 + $0x3a0] sm:$0xff]
    %v1994 = vld [vmem:[#allocation5 + $0x3a8] sm:$0xff]
    %v1995 = vld [vmem:[#allocation5 + $0x3b0] sm:$0xff]
    %v1996 = vld [vmem:[#allocation5 + $0x3b8] sm:$0xff]
    %v1997 = vld [vmem:[#allocation5 + $0x3c0] sm:$0xff]
    %v1998 = vld [vmem:[#allocation5 + $0x3c8] sm:$0xff]
    %v1999 = vld [vmem:[#allocation5 + $0x3d0] sm:$0xff]
    %v2000 = vld [vmem:[#allocation5 + $0x3d8] sm:$0xff]
    %v2001 = vld [vmem:[#allocation5 + $0x3e0] sm:$0xff]
    %v2002 = vld [vmem:[#allocation5 + $0x3e8] sm:$0xff]
    %v2003 = vld [vmem:[#allocation5 + $0x3f0] sm:$0xff]
    %v2004 = vld [vmem:[#allocation5 + $0x3f8] sm:$0xff]
    %v2005 = vld [vmem:[%s4] sm:$0xf]
    %v2007 = vperm.slane %v2005, 0
    %v2008 = vperm.slane %v2005, 1
    %v2009 = vperm.slane %v2005, 2
    %v2010 = vperm.slane %v2005, 3
    %v2143 = vunpack.c.l.b16 %v1877
    %v2144 = vunpack.c.h.b16 %v1877
    %v2145 = vunpack.c.l.b16 %v1878
    %v2146 = vunpack.c.h.b16 %v1878
    %v2147 = vunpack.c.l.b16 %v1879
    %v2148 = vunpack.c.h.b16 %v1879
    %v2149 = vunpack.c.l.b16 %v1880
    %v2150 = vunpack.c.h.b16 %v1880
    %v2151 = vunpack.c.l.b16 %v1881
    %v2152 = vunpack.c.h.b16 %v1881
    %v2153 = vunpack.c.l.b16 %v1882
    %v2154 = vunpack.c.h.b16 %v1882
    %v2155 = vunpack.c.l.b16 %v1883
    %v2156 = vunpack.c.h.b16 %v1883
    %v2157 = vunpack.c.l.b16 %v1884
    %v2158 = vunpack.c.h.b16 %v1884
    %v2159 = vunpack.c.l.b16 %v1885
    %v2160 = vunpack.c.h.b16 %v1885
    %v2161 = vunpack.c.l.b16 %v1886
    %v2162 = vunpack.c.h.b16 %v1886
    %v2163 = vunpack.c.l.b16 %v1887
    %v2164 = vunpack.c.h.b16 %v1887
    %v2165 = vunpack.c.l.b16 %v1888
    %v2166 = vunpack.c.h.b16 %v1888
    %v2167 = vunpack.c.l.b16 %v1889
    %v2168 = vunpack.c.h.b16 %v1889
    %v2169 = vunpack.c.l.b16 %v1890
    %v2170 = vunpack.c.h.b16 %v1890
    %v2171 = vunpack.c.l.b16 %v1891
    %v2172 = vunpack.c.h.b16 %v1891
    %v2173 = vunpack.c.l.b16 %v1892
    %v2174 = vunpack.c.h.b16 %v1892
    %v2175 = vunpack.c.l.b16 %v1893
    %v2176 = vunpack.c.h.b16 %v1893
    %v2177 = vunpack.c.l.b16 %v1894
    %v2178 = vunpack.c.h.b16 %v1894
    %v2179 = vunpack.c.l.b16 %v1895
    %v2180 = vunpack.c.h.b16 %v1895
    %v2181 = vunpack.c.l.b16 %v1896
    %v2182 = vunpack.c.h.b16 %v1896
    %v2183 = vunpack.c.l.b16 %v1897
    %v2184 = vunpack.c.h.b16 %v1897
    %v2185 = vunpack.c.l.b16 %v1898
    %v2186 = vunpack.c.h.b16 %v1898
    %v2187 = vunpack.c.l.b16 %v1899
    %v2188 = vunpack.c.h.b16 %v1899
    %v2189 = vunpack.c.l.b16 %v1900
    %v2190 = vunpack.c.h.b16 %v1900
    %v2191 = vunpack.c.l.b16 %v1901
    %v2192 = vunpack.c.h.b16 %v1901
    %v2193 = vunpack.c.l.b16 %v1902
    %v2194 = vunpack.c.h.b16 %v1902
    %v2195 = vunpack.c.l.b16 %v1903
    %v2196 = vunpack.c.h.b16 %v1903
    %v2197 = vunpack.c.l.b16 %v1904
    %v2198 = vunpack.c.h.b16 %v1904
    %v2199 = vunpack.c.l.b16 %v1905
    %v2200 = vunpack.c.h.b16 %v1905
    %v2201 = vunpack.c.l.b16 %v1906
    %v2202 = vunpack.c.h.b16 %v1906
    %v2203 = vunpack.c.l.b16 %v1907
    %v2204 = vunpack.c.h.b16 %v1907
    %v2205 = vunpack.c.l.b16 %v1908
    %v2206 = vunpack.c.h.b16 %v1908
    %v2207 = vunpack.c.l.b16 %v1909
    %v2208 = vunpack.c.h.b16 %v1909
    %v2209 = vunpack.c.l.b16 %v1910
    %v2210 = vunpack.c.h.b16 %v1910
    %v2211 = vunpack.c.l.b16 %v1911
    %v2212 = vunpack.c.h.b16 %v1911
    %v2213 = vunpack.c.l.b16 %v1912
    %v2214 = vunpack.c.h.b16 %v1912
    %v2215 = vunpack.c.l.b16 %v1913
    %v2216 = vunpack.c.h.b16 %v1913
    %v2217 = vunpack.c.l.b16 %v1914
    %v2218 = vunpack.c.h.b16 %v1914
    %v2219 = vunpack.c.l.b16 %v1915
    %v2220 = vunpack.c.h.b16 %v1915
    %v2221 = vunpack.c.l.b16 %v1916
    %v2222 = vunpack.c.h.b16 %v1916
    %v2223 = vunpack.c.l.b16 %v1917
    %v2224 = vunpack.c.h.b16 %v1917
    %v2225 = vunpack.c.l.b16 %v1918
    %v2226 = vunpack.c.h.b16 %v1918
    %v2227 = vunpack.c.l.b16 %v1919
    %v2228 = vunpack.c.h.b16 %v1919
    %v2229 = vunpack.c.l.b16 %v1920
    %v2230 = vunpack.c.h.b16 %v1920
    %v2231 = vunpack.c.l.b16 %v1921
    %v2232 = vunpack.c.h.b16 %v1921
    %v2233 = vunpack.c.l.b16 %v1922
    %v2234 = vunpack.c.h.b16 %v1922
    %v2235 = vunpack.c.l.b16 %v1923
    %v2236 = vunpack.c.h.b16 %v1923
    %v2237 = vunpack.c.l.b16 %v1924
    %v2238 = vunpack.c.h.b16 %v1924
    %v2239 = vunpack.c.l.b16 %v1925
    %v2240 = vunpack.c.h.b16 %v1925
    %v2241 = vunpack.c.l.b16 %v1926
    %v2242 = vunpack.c.h.b16 %v1926
    %v2243 = vunpack.c.l.b16 %v1927
    %v2244 = vunpack.c.h.b16 %v1927
    %v2245 = vunpack.c.l.b16 %v1928
    %v2246 = vunpack.c.h.b16 %v1928
    %v2247 = vunpack.c.l.b16 %v1929
    %v2248 = vunpack.c.h.b16 %v1929
    %v2249 = vunpack.c.l.b16 %v1930
    %v2250 = vunpack.c.h.b16 %v1930
    %v2251 = vunpack.c.l.b16 %v1931
    %v2252 = vunpack.c.h.b16 %v1931
    %v2253 = vunpack.c.l.b16 %v1932
    %v2254 = vunpack.c.h.b16 %v1932
    %v2255 = vunpack.c.l.b16 %v1933
    %v2256 = vunpack.c.h.b16 %v1933
    %v2257 = vunpack.c.l.b16 %v1934
    %v2258 = vunpack.c.h.b16 %v1934
    %v2259 = vunpack.c.l.b16 %v1935
    %v2260 = vunpack.c.h.b16 %v1935
    %v2261 = vunpack.c.l.b16 %v1936
    %v2262 = vunpack.c.h.b16 %v1936
    %v2263 = vunpack.c.l.b16 %v1937
    %v2264 = vunpack.c.h.b16 %v1937
    %v2265 = vunpack.c.l.b16 %v1938
    %v2266 = vunpack.c.h.b16 %v1938
    %v2267 = vunpack.c.l.b16 %v1939
    %v2268 = vunpack.c.h.b16 %v1939
    %v2269 = vunpack.c.l.b16 %v1940
    %v2270 = vunpack.c.h.b16 %v1940
    %v2271 = vunpack.c.l.b16 %v1941
    %v2272 = vunpack.c.h.b16 %v1941
    %v2273 = vunpack.c.l.b16 %v1942
    %v2274 = vunpack.c.h.b16 %v1942
    %v2275 = vunpack.c.l.b16 %v1943
    %v2276 = vunpack.c.h.b16 %v1943
    %v2277 = vunpack.c.l.b16 %v1944
    %v2278 = vunpack.c.h.b16 %v1944
    %v2279 = vunpack.c.l.b16 %v1945
    %v2280 = vunpack.c.h.b16 %v1945
    %v2281 = vunpack.c.l.b16 %v1946
    %v2282 = vunpack.c.h.b16 %v1946
    %v2283 = vunpack.c.l.b16 %v1947
    %v2284 = vunpack.c.h.b16 %v1947
    %v2285 = vunpack.c.l.b16 %v1948
    %v2286 = vunpack.c.h.b16 %v1948
    %v2287 = vunpack.c.l.b16 %v1949
    %v2288 = vunpack.c.h.b16 %v1949
    %v2289 = vunpack.c.l.b16 %v1950
    %v2290 = vunpack.c.h.b16 %v1950
    %v2291 = vunpack.c.l.b16 %v1951
    %v2292 = vunpack.c.h.b16 %v1951
    %v2293 = vunpack.c.l.b16 %v1952
    %v2294 = vunpack.c.h.b16 %v1952
    %v2295 = vunpack.c.l.b16 %v1953
    %v2296 = vunpack.c.h.b16 %v1953
    %v2297 = vunpack.c.l.b16 %v1954
    %v2298 = vunpack.c.h.b16 %v1954
    %v2299 = vunpack.c.l.b16 %v1955
    %v2300 = vunpack.c.h.b16 %v1955
    %v2301 = vunpack.c.l.b16 %v1956
    %v2302 = vunpack.c.h.b16 %v1956
    %v2303 = vunpack.c.l.b16 %v1957
    %v2304 = vunpack.c.h.b16 %v1957
    %v2305 = vunpack.c.l.b16 %v1958
    %v2306 = vunpack.c.h.b16 %v1958
    %v2307 = vunpack.c.l.b16 %v1959
    %v2308 = vunpack.c.h.b16 %v1959
    %v2309 = vunpack.c.l.b16 %v1960
    %v2310 = vunpack.c.h.b16 %v1960
    %v2311 = vunpack.c.l.b16 %v1961
    %v2312 = vunpack.c.h.b16 %v1961
    %v2313 = vunpack.c.l.b16 %v1962
    %v2314 = vunpack.c.h.b16 %v1962
    %v2315 = vunpack.c.l.b16 %v1963
    %v2316 = vunpack.c.h.b16 %v1963
    %v2317 = vunpack.c.l.b16 %v1964
    %v2318 = vunpack.c.h.b16 %v1964
    %v2319 = vunpack.c.l.b16 %v1965
    %v2320 = vunpack.c.h.b16 %v1965
    %v2321 = vunpack.c.l.b16 %v1966
    %v2322 = vunpack.c.h.b16 %v1966
    %v2323 = vunpack.c.l.b16 %v1967
    %v2324 = vunpack.c.h.b16 %v1967
    %v2325 = vunpack.c.l.b16 %v1968
    %v2326 = vunpack.c.h.b16 %v1968
    %v2327 = vunpack.c.l.b16 %v1969
    %v2328 = vunpack.c.h.b16 %v1969
    %v2329 = vunpack.c.l.b16 %v1970
    %v2330 = vunpack.c.h.b16 %v1970
    %v2331 = vunpack.c.l.b16 %v1971
    %v2332 = vunpack.c.h.b16 %v1971
    %v2333 = vunpack.c.l.b16 %v1972
    %v2334 = vunpack.c.h.b16 %v1972
    %v2335 = vunpack.c.l.b16 %v1973
    %v2336 = vunpack.c.h.b16 %v1973
    %v2337 = vunpack.c.l.b16 %v1974
    %v2338 = vunpack.c.h.b16 %v1974
    %v2339 = vunpack.c.l.b16 %v1975
    %v2340 = vunpack.c.h.b16 %v1975
    %v2341 = vunpack.c.l.b16 %v1976
    %v2342 = vunpack.c.h.b16 %v1976
    %v2343 = vunpack.c.l.b16 %v1977
    %v2344 = vunpack.c.h.b16 %v1977
    %v2345 = vunpack.c.l.b16 %v1978
    %v2346 = vunpack.c.h.b16 %v1978
    %v2347 = vunpack.c.l.b16 %v1979
    %v2348 = vunpack.c.h.b16 %v1979
    %v2349 = vunpack.c.l.b16 %v1980
    %v2350 = vunpack.c.h.b16 %v1980
    %v2351 = vunpack.c.l.b16 %v1981
    %v2352 = vunpack.c.h.b16 %v1981
    %v2353 = vunpack.c.l.b16 %v1982
    %v2354 = vunpack.c.h.b16 %v1982
    %v2355 = vunpack.c.l.b16 %v1983
    %v2356 = vunpack.c.h.b16 %v1983
    %v2357 = vunpack.c.l.b16 %v1984
    %v2358 = vunpack.c.h.b16 %v1984
    %v2359 = vunpack.c.l.b16 %v1985
    %v2360 = vunpack.c.h.b16 %v1985
    %v2361 = vunpack.c.l.b16 %v1986
    %v2362 = vunpack.c.h.b16 %v1986
    %v2363 = vunpack.c.l.b16 %v1987
    %v2364 = vunpack.c.h.b16 %v1987
    %v2365 = vunpack.c.l.b16 %v1988
    %v2366 = vunpack.c.h.b16 %v1988
    %v2367 = vunpack.c.l.b16 %v1989
    %v2368 = vunpack.c.h.b16 %v1989
    %v2369 = vunpack.c.l.b16 %v1990
    %v2370 = vunpack.c.h.b16 %v1990
    %v2371 = vunpack.c.l.b16 %v1991
    %v2372 = vunpack.c.h.b16 %v1991
    %v2373 = vunpack.c.l.b16 %v1992
    %v2374 = vunpack.c.h.b16 %v1992
    %v2375 = vunpack.c.l.b16 %v1993
    %v2376 = vunpack.c.h.b16 %v1993
    %v2377 = vunpack.c.l.b16 %v1994
    %v2378 = vunpack.c.h.b16 %v1994
    %v2379 = vunpack.c.l.b16 %v1995
    %v2380 = vunpack.c.h.b16 %v1995
    %v2381 = vunpack.c.l.b16 %v1996
    %v2382 = vunpack.c.h.b16 %v1996
    %v2383 = vunpack.c.l.b16 %v1997
    %v2384 = vunpack.c.h.b16 %v1997
    %v2385 = vunpack.c.l.b16 %v1998
    %v2386 = vunpack.c.h.b16 %v1998
    %v2387 = vunpack.c.l.b16 %v1999
    %v2388 = vunpack.c.h.b16 %v1999
    %v2389 = vunpack.c.l.b16 %v2000
    %v2390 = vunpack.c.h.b16 %v2000
    %v2391 = vunpack.c.l.b16 %v2001
    %v2392 = vunpack.c.h.b16 %v2001
    %v2393 = vunpack.c.l.b16 %v2002
    %v2394 = vunpack.c.h.b16 %v2002
    %v2395 = vunpack.c.l.b16 %v2003
    %v2396 = vunpack.c.h.b16 %v2003
    %v2397 = vunpack.c.l.b16 %v2004
    %v2398 = vunpack.c.h.b16 %v2004
    %v2399 = vpack.c.b16 %v2147, %v2143
    %v2400 = vpack.c.b16 %v2148, %v2144
    %v2401 = vpack.c.b16 %v2149, %v2145
    %v2402 = vpack.c.b16 %v2150, %v2146
    %v2403 = vpack.c.b16 %v2155, %v2151
    %v2404 = vpack.c.b16 %v2156, %v2152
    %v2405 = vpack.c.b16 %v2157, %v2153
    %v2406 = vpack.c.b16 %v2158, %v2154
    %v2407 = vpack.c.b16 %v2163, %v2159
    %v2408 = vpack.c.b16 %v2164, %v2160
    %v2409 = vpack.c.b16 %v2165, %v2161
    %v2410 = vpack.c.b16 %v2166, %v2162
    %v2411 = vpack.c.b16 %v2171, %v2167
    %v2412 = vpack.c.b16 %v2172, %v2168
    %v2413 = vpack.c.b16 %v2173, %v2169
    %v2414 = vpack.c.b16 %v2174, %v2170
    %v2415 = vpack.c.b16 %v2179, %v2175
    %v2416 = vpack.c.b16 %v2180, %v2176
    %v2417 = vpack.c.b16 %v2181, %v2177
    %v2418 = vpack.c.b16 %v2182, %v2178
    %v2419 = vpack.c.b16 %v2187, %v2183
    %v2420 = vpack.c.b16 %v2188, %v2184
    %v2421 = vpack.c.b16 %v2189, %v2185
    %v2422 = vpack.c.b16 %v2190, %v2186
    %v2423 = vpack.c.b16 %v2195, %v2191
    %v2424 = vpack.c.b16 %v2196, %v2192
    %v2425 = vpack.c.b16 %v2197, %v2193
    %v2426 = vpack.c.b16 %v2198, %v2194
    %v2427 = vpack.c.b16 %v2203, %v2199
    %v2428 = vpack.c.b16 %v2204, %v2200
    %v2429 = vpack.c.b16 %v2205, %v2201
    %v2430 = vpack.c.b16 %v2206, %v2202
    %v2431 = vpack.c.b16 %v2211, %v2207
    %v2432 = vpack.c.b16 %v2212, %v2208
    %v2433 = vpack.c.b16 %v2213, %v2209
    %v2434 = vpack.c.b16 %v2214, %v2210
    %v2435 = vpack.c.b16 %v2219, %v2215
    %v2436 = vpack.c.b16 %v2220, %v2216
    %v2437 = vpack.c.b16 %v2221, %v2217
    %v2438 = vpack.c.b16 %v2222, %v2218
    %v2439 = vpack.c.b16 %v2227, %v2223
    %v2440 = vpack.c.b16 %v2228, %v2224
    %v2441 = vpack.c.b16 %v2229, %v2225
    %v2442 = vpack.c.b16 %v2230, %v2226
    %v2443 = vpack.c.b16 %v2235, %v2231
    %v2444 = vpack.c.b16 %v2236, %v2232
    %v2445 = vpack.c.b16 %v2237, %v2233
    %v2446 = vpack.c.b16 %v2238, %v2234
    %v2447 = vpack.c.b16 %v2243, %v2239
    %v2448 = vpack.c.b16 %v2244, %v2240
    %v2449 = vpack.c.b16 %v2245, %v2241
    %v2450 = vpack.c.b16 %v2246, %v2242
    %v2451 = vpack.c.b16 %v2251, %v2247
    %v2452 = vpack.c.b16 %v2252, %v2248
    %v2453 = vpack.c.b16 %v2253, %v2249
    %v2454 = vpack.c.b16 %v2254, %v2250
    %v2455 = vpack.c.b16 %v2259, %v2255
    %v2456 = vpack.c.b16 %v2260, %v2256
    %v2457 = vpack.c.b16 %v2261, %v2257
    %v2458 = vpack.c.b16 %v2262, %v2258
    %v2459 = vpack.c.b16 %v2267, %v2263
    %v2460 = vpack.c.b16 %v2268, %v2264
    %v2461 = vpack.c.b16 %v2269, %v2265
    %v2462 = vpack.c.b16 %v2270, %v2266
    %v2463 = vpack.c.b16 %v2275, %v2271
    %v2464 = vpack.c.b16 %v2276, %v2272
    %v2465 = vpack.c.b16 %v2277, %v2273
    %v2466 = vpack.c.b16 %v2278, %v2274
    %v2467 = vpack.c.b16 %v2283, %v2279
    %v2468 = vpack.c.b16 %v2284, %v2280
    %v2469 = vpack.c.b16 %v2285, %v2281
    %v2470 = vpack.c.b16 %v2286, %v2282
    %v2471 = vpack.c.b16 %v2291, %v2287
    %v2472 = vpack.c.b16 %v2292, %v2288
    %v2473 = vpack.c.b16 %v2293, %v2289
    %v2474 = vpack.c.b16 %v2294, %v2290
    %v2475 = vpack.c.b16 %v2299, %v2295
    %v2476 = vpack.c.b16 %v2300, %v2296
    %v2477 = vpack.c.b16 %v2301, %v2297
    %v2478 = vpack.c.b16 %v2302, %v2298
    %v2479 = vpack.c.b16 %v2307, %v2303
    %v2480 = vpack.c.b16 %v2308, %v2304
    %v2481 = vpack.c.b16 %v2309, %v2305
    %v2482 = vpack.c.b16 %v2310, %v2306
    %v2483 = vpack.c.b16 %v2315, %v2311
    %v2484 = vpack.c.b16 %v2316, %v2312
    %v2485 = vpack.c.b16 %v2317, %v2313
    %v2486 = vpack.c.b16 %v2318, %v2314
    %v2487 = vpack.c.b16 %v2323, %v2319
    %v2488 = vpack.c.b16 %v2324, %v2320
    %v2489 = vpack.c.b16 %v2325, %v2321
    %v2490 = vpack.c.b16 %v2326, %v2322
    %v2491 = vpack.c.b16 %v2331, %v2327
    %v2492 = vpack.c.b16 %v2332, %v2328
    %v2493 = vpack.c.b16 %v2333, %v2329
    %v2494 = vpack.c.b16 %v2334, %v2330
    %v2495 = vpack.c.b16 %v2339, %v2335
    %v2496 = vpack.c.b16 %v2340, %v2336
    %v2497 = vpack.c.b16 %v2341, %v2337
    %v2498 = vpack.c.b16 %v2342, %v2338
    %v2499 = vpack.c.b16 %v2347, %v2343
    %v2500 = vpack.c.b16 %v2348, %v2344
    %v2501 = vpack.c.b16 %v2349, %v2345
    %v2502 = vpack.c.b16 %v2350, %v2346
    %v2503 = vpack.c.b16 %v2355, %v2351
    %v2504 = vpack.c.b16 %v2356, %v2352
    %v2505 = vpack.c.b16 %v2357, %v2353
    %v2506 = vpack.c.b16 %v2358, %v2354
    %v2507 = vpack.c.b16 %v2363, %v2359
    %v2508 = vpack.c.b16 %v2364, %v2360
    %v2509 = vpack.c.b16 %v2365, %v2361
    %v2510 = vpack.c.b16 %v2366, %v2362
    %v2511 = vpack.c.b16 %v2371, %v2367
    %v2512 = vpack.c.b16 %v2372, %v2368
    %v2513 = vpack.c.b16 %v2373, %v2369
    %v2514 = vpack.c.b16 %v2374, %v2370
    %v2515 = vpack.c.b16 %v2379, %v2375
    %v2516 = vpack.c.b16 %v2380, %v2376
    %v2517 = vpack.c.b16 %v2381, %v2377
    %v2518 = vpack.c.b16 %v2382, %v2378
    %v2519 = vpack.c.b16 %v2387, %v2383
    %v2520 = vpack.c.b16 %v2388, %v2384
    %v2521 = vpack.c.b16 %v2389, %v2385
    %v2522 = vpack.c.b16 %v2390, %v2386
    %v2523 = vpack.c.b16 %v2395, %v2391
    %v2524 = vpack.c.b16 %v2396, %v2392
    %v2525 = vpack.c.b16 %v2397, %v2393
    %v2526 = vpack.c.b16 %v2398, %v2394
    %2655 = vmatpush.bf16.msra.mxu0 %v2427
    %2656 = vmatpush.bf16.msra.mxu0 %v2423
    %2657 = vmatpush.bf16.msra.mxu0 %v2419
    %2658 = vmatpush.bf16.msra.mxu0 %v2415
    %2659 = vmatpush.bf16.msra.mxu0 %v2411
    %2660 = vmatpush.bf16.msra.mxu0 %v2407
    %2661 = vmatpush.bf16.msra.mxu0 %v2403
    %2662 = vmatpush.bf16.msra.mxu0 %v2399
    %2663 = vmatmul.bf16.gmra.mxu0 %v1873
    %v2664 = vpop.f32.mrf.mxu0
    %v2665 = vadd.f32 %v2007, %v2664
    %v2666 = vpop.f32.mrf.mxu0
    %v2667 = vadd.f32 %v2007, %v2666
    %2668 = vdwg.mxu0
    %2669 = vmatpush.bf16.msra.mxu0 %v2459
    %2670 = vmatpush.bf16.msra.mxu0 %v2455
    %2671 = vmatpush.bf16.msra.mxu0 %v2451
    %2672 = vmatpush.bf16.msra.mxu0 %v2447
    %2673 = vmatpush.bf16.msra.mxu0 %v2443
    %2674 = vmatpush.bf16.msra.mxu0 %v2439
    %2675 = vmatpush.bf16.msra.mxu0 %v2435
    %2676 = vmatpush.bf16.msra.mxu0 %v2431
    %2677 = vmatmul.bf16.gmra.mxu0 %v1874
    %v2678 = vpop.f32.mrf.mxu0
    %v2679 = vadd.f32 %v2665, %v2678
    %v2680 = vpop.f32.mrf.mxu0
    %v2681 = vadd.f32 %v2667, %v2680
    %2682 = vdwg.mxu0
    %2683 = vmatpush.bf16.msra.mxu0 %v2491
    %2684 = vmatpush.bf16.msra.mxu0 %v2487
    %2685 = vmatpush.bf16.msra.mxu0 %v2483
    %2686 = vmatpush.bf16.msra.mxu0 %v2479
    %2687 = vmatpush.bf16.msra.mxu0 %v2475
    %2688 = vmatpush.bf16.msra.mxu0 %v2471
    %2689 = vmatpush.bf16.msra.mxu0 %v2467
    %2690 = vmatpush.bf16.msra.mxu0 %v2463
    %2691 = vmatmul.bf16.gmra.mxu0 %v1875
    %v2692 = vpop.f32.mrf.mxu0
    %v2693 = vadd.f32 %v2679, %v2692
    %v2694 = vpop.f32.mrf.mxu0
    %v2695 = vadd.f32 %v2681, %v2694
    %2696 = vdwg.mxu0
    %2697 = vmatpush.bf16.msra.mxu0 %v2523
    %2698 = vmatpush.bf16.msra.mxu0 %v2519
    %2699 = vmatpush.bf16.msra.mxu0 %v2515
    %2700 = vmatpush.bf16.msra.mxu0 %v2511
    %2701 = vmatpush.bf16.msra.mxu0 %v2507
    %2702 = vmatpush.bf16.msra.mxu0 %v2503
    %2703 = vmatpush.bf16.msra.mxu0 %v2499
    %2704 = vmatpush.bf16.msra.mxu0 %v2495
    %2705 = vmatmul.bf16.gmra.mxu0 %v1876
    %v2706 = vpop.f32.mrf.mxu0
    %v2707 = vadd.f32 %v2693, %v2706
    %v2708 = vpop.f32.mrf.mxu0
    %v2709 = vadd.f32 %v2695, %v2708
    %2710 = vdwg.mxu0
    %2711 = vmatpush.bf16.msra.mxu0 %v2428
    %2712 = vmatpush.bf16.msra.mxu0 %v2424
    %2713 = vmatpush.bf16.msra.mxu0 %v2420
    %2714 = vmatpush.bf16.msra.mxu0 %v2416
    %2715 = vmatpush.bf16.msra.mxu0 %v2412
    %2716 = vmatpush.bf16.msra.mxu0 %v2408
    %2717 = vmatpush.bf16.msra.mxu0 %v2404
    %2718 = vmatpush.bf16.msra.mxu0 %v2400
    %2719 = vmatmul.bf16.gmra.mxu0 %v1873
    %v2720 = vpop.f32.mrf.mxu0
    %v2721 = vadd.f32 %v2008, %v2720
    %v2722 = vpop.f32.mrf.mxu0
    %v2723 = vadd.f32 %v2008, %v2722
    %2724 = vdwg.mxu0
    %2725 = vmatpush.bf16.msra.mxu0 %v2460
    %2726 = vmatpush.bf16.msra.mxu0 %v2456
    %2727 = vmatpush.bf16.msra.mxu0 %v2452
    %2728 = vmatpush.bf16.msra.mxu0 %v2448
    %2729 = vmatpush.bf16.msra.mxu0 %v2444
    %2730 = vmatpush.bf16.msra.mxu0 %v2440
    %2731 = vmatpush.bf16.msra.mxu0 %v2436
    %2732 = vmatpush.bf16.msra.mxu0 %v2432
    %2733 = vmatmul.bf16.gmra.mxu0 %v1874
    %v2734 = vpop.f32.mrf.mxu0
    %v2735 = vadd.f32 %v2721, %v2734
    %v2736 = vpop.f32.mrf.mxu0
    %v2737 = vadd.f32 %v2723, %v2736
    %2738 = vdwg.mxu0
    %2739 = vmatpush.bf16.msra.mxu0 %v2492
    %2740 = vmatpush.bf16.msra.mxu0 %v2488
    %2741 = vmatpush.bf16.msra.mxu0 %v2484
    %2742 = vmatpush.bf16.msra.mxu0 %v2480
    %2743 = vmatpush.bf16.msra.mxu0 %v2476
    %2744 = vmatpush.bf16.msra.mxu0 %v2472
    %2745 = vmatpush.bf16.msra.mxu0 %v2468
    %2746 = vmatpush.bf16.msra.mxu0 %v2464
    %2747 = vmatmul.bf16.gmra.mxu0 %v1875
    %v2748 = vpop.f32.mrf.mxu0
    %v2749 = vadd.f32 %v2735, %v2748
    %v2750 = vpop.f32.mrf.mxu0
    %v2751 = vadd.f32 %v2737, %v2750
    %2752 = vdwg.mxu0
    %2753 = vmatpush.bf16.msra.mxu0 %v2524
    %2754 = vmatpush.bf16.msra.mxu0 %v2520
    %2755 = vmatpush.bf16.msra.mxu0 %v2516
    %2756 = vmatpush.bf16.msra.mxu0 %v2512
    %2757 = vmatpush.bf16.msra.mxu0 %v2508
    %2758 = vmatpush.bf16.msra.mxu0 %v2504
    %2759 = vmatpush.bf16.msra.mxu0 %v2500
    %2760 = vmatpush.bf16.msra.mxu0 %v2496
    %2761 = vmatmul.bf16.gmra.mxu0 %v1876
    %v2762 = vpop.f32.mrf.mxu0
    %v2763 = vadd.f32 %v2749, %v2762
    %v2764 = vpop.f32.mrf.mxu0
    %v2765 = vadd.f32 %v2751, %v2764
    %2766 = vdwg.mxu0
    %2767 = vmatpush.bf16.msra.mxu0 %v2429
    %2768 = vmatpush.bf16.msra.mxu0 %v2425
    %2769 = vmatpush.bf16.msra.mxu0 %v2421
    %2770 = vmatpush.bf16.msra.mxu0 %v2417
    %2771 = vmatpush.bf16.msra.mxu0 %v2413
    %2772 = vmatpush.bf16.msra.mxu0 %v2409
    %2773 = vmatpush.bf16.msra.mxu0 %v2405
    %2774 = vmatpush.bf16.msra.mxu0 %v2401
    %2775 = vmatmul.bf16.gmra.mxu0 %v1873
    %v2776 = vpop.f32.mrf.mxu0
    %v2777 = vadd.f32 %v2009, %v2776
    %v2778 = vpop.f32.mrf.mxu0
    %v2779 = vadd.f32 %v2009, %v2778
    %2780 = vdwg.mxu0
    %2781 = vmatpush.bf16.msra.mxu0 %v2461
    %2782 = vmatpush.bf16.msra.mxu0 %v2457
    %2783 = vmatpush.bf16.msra.mxu0 %v2453
    %2784 = vmatpush.bf16.msra.mxu0 %v2449
    %2785 = vmatpush.bf16.msra.mxu0 %v2445
    %2786 = vmatpush.bf16.msra.mxu0 %v2441
    %2787 = vmatpush.bf16.msra.mxu0 %v2437
    %2788 = vmatpush.bf16.msra.mxu0 %v2433
    %2789 = vmatmul.bf16.gmra.mxu0 %v1874
    %v2790 = vpop.f32.mrf.mxu0
    %v2791 = vadd.f32 %v2777, %v2790
    %v2792 = vpop.f32.mrf.mxu0
    %v2793 = vadd.f32 %v2779, %v2792
    %2794 = vdwg.mxu0
    %2795 = vmatpush.bf16.msra.mxu0 %v2493
    %2796 = vmatpush.bf16.msra.mxu0 %v2489
    %2797 = vmatpush.bf16.msra.mxu0 %v2485
    %2798 = vmatpush.bf16.msra.mxu0 %v2481
    %2799 = vmatpush.bf16.msra.mxu0 %v2477
    %2800 = vmatpush.bf16.msra.mxu0 %v2473
    %2801 = vmatpush.bf16.msra.mxu0 %v2469
    %2802 = vmatpush.bf16.msra.mxu0 %v2465
    %2803 = vmatmul.bf16.gmra.mxu0 %v1875
    %v2804 = vpop.f32.mrf.mxu0
    %v2805 = vadd.f32 %v2791, %v2804
    %v2806 = vpop.f32.mrf.mxu0
    %v2807 = vadd.f32 %v2793, %v2806
    %2808 = vdwg.mxu0
    %2809 = vmatpush.bf16.msra.mxu0 %v2525
    %2810 = vmatpush.bf16.msra.mxu0 %v2521
    %2811 = vmatpush.bf16.msra.mxu0 %v2517
    %2812 = vmatpush.bf16.msra.mxu0 %v2513
    %2813 = vmatpush.bf16.msra.mxu0 %v2509
    %2814 = vmatpush.bf16.msra.mxu0 %v2505
    %2815 = vmatpush.bf16.msra.mxu0 %v2501
    %2816 = vmatpush.bf16.msra.mxu0 %v2497
    %2817 = vmatmul.bf16.gmra.mxu0 %v1876
    %v2818 = vpop.f32.mrf.mxu0
    %v2819 = vadd.f32 %v2805, %v2818
    %v2820 = vpop.f32.mrf.mxu0
    %v2821 = vadd.f32 %v2807, %v2820
    %2822 = vdwg.mxu0
    %2823 = vmatpush.bf16.msra.mxu0 %v2430
    %2824 = vmatpush.bf16.msra.mxu0 %v2426
    %2825 = vmatpush.bf16.msra.mxu0 %v2422
    %2826 = vmatpush.bf16.msra.mxu0 %v2418
    %2827 = vmatpush.bf16.msra.mxu0 %v2414
    %2828 = vmatpush.bf16.msra.mxu0 %v2410
    %2829 = vmatpush.bf16.msra.mxu0 %v2406
    %2830 = vmatpush.bf16.msra.mxu0 %v2402
    %2831 = vmatmul.bf16.gmra.mxu0 %v1873
    %v2832 = vpop.f32.mrf.mxu0
    %v2833 = vadd.f32 %v2010, %v2832
    %v2834 = vpop.f32.mrf.mxu0
    %v2835 = vadd.f32 %v2010, %v2834
    %2836 = vdwg.mxu0
    %2837 = vmatpush.bf16.msra.mxu0 %v2462
    %2838 = vmatpush.bf16.msra.mxu0 %v2458
    %2839 = vmatpush.bf16.msra.mxu0 %v2454
    %2840 = vmatpush.bf16.msra.mxu0 %v2450
    %2841 = vmatpush.bf16.msra.mxu0 %v2446
    %2842 = vmatpush.bf16.msra.mxu0 %v2442
    %2843 = vmatpush.bf16.msra.mxu0 %v2438
    %2844 = vmatpush.bf16.msra.mxu0 %v2434
    %2845 = vmatmul.bf16.gmra.mxu0 %v1874
    %v2846 = vpop.f32.mrf.mxu0
    %v2847 = vadd.f32 %v2833, %v2846
    %v2848 = vpop.f32.mrf.mxu0
    %v2849 = vadd.f32 %v2835, %v2848
    %2850 = vdwg.mxu0
    %2851 = vmatpush.bf16.msra.mxu0 %v2494
    %2852 = vmatpush.bf16.msra.mxu0 %v2490
    %2853 = vmatpush.bf16.msra.mxu0 %v2486
    %2854 = vmatpush.bf16.msra.mxu0 %v2482
    %2855 = vmatpush.bf16.msra.mxu0 %v2478
    %2856 = vmatpush.bf16.msra.mxu0 %v2474
    %2857 = vmatpush.bf16.msra.mxu0 %v2470
    %2858 = vmatpush.bf16.msra.mxu0 %v2466
    %2859 = vmatmul.bf16.gmra.mxu0 %v1875
    %v2860 = vpop.f32.mrf.mxu0
    %v2861 = vadd.f32 %v2847, %v2860
    %v2862 = vpop.f32.mrf.mxu0
    %v2863 = vadd.f32 %v2849, %v2862
    %2864 = vdwg.mxu0
    %2865 = vmatpush.bf16.msra.mxu0 %v2526
    %2866 = vmatpush.bf16.msra.mxu0 %v2522
    %2867 = vmatpush.bf16.msra.mxu0 %v2518
    %2868 = vmatpush.bf16.msra.mxu0 %v2514
    %2869 = vmatpush.bf16.msra.mxu0 %v2510
    %2870 = vmatpush.bf16.msra.mxu0 %v2506
    %2871 = vmatpush.bf16.msra.mxu0 %v2502
    %2872 = vmatpush.bf16.msra.mxu0 %v2498
    %2873 = vmatmul.bf16.gmra.mxu0 %v1876
    %v2874 = vpop.f32.mrf.mxu0
    %v2875 = vadd.f32 %v2861, %v2874
    %v2876 = vpop.f32.mrf.mxu0
    %v2877 = vadd.f32 %v2863, %v2876
    %2878 = vdwg.mxu0
    %v2879 = vmax.f32 %v2707, 0.0
    %v2880 = vmax.f32 %v2763, 0.0
    %v2881 = vmax.f32 %v2819, 0.0
    %v2882 = vmax.f32 %v2875, 0.0
    %v2883 = vmax.f32 %v2709, 0.0
    %v2884 = vmax.f32 %v2765, 0.0
    %v2885 = vmax.f32 %v2821, 0.0
    %v2886 = vmax.f32 %v2877, 0.0
    %v2887 = vpack.c.bf16 %v2883, %v2879
    %v2888 = vpack.c.bf16 %v2884, %v2880
    %v2889 = vpack.c.bf16 %v2885, %v2881
    %v2890 = vpack.c.bf16 %v2886, %v2882
    %v2891 = vld [vmem:[#allocation7] sm:$0xf]
    %v2892 = vld [vmem:[#allocation7 + $0x4] sm:$0xf]
    %v2893 = vld [vmem:[#allocation7 + $0x8] sm:$0xf]
    %v2894 = vld [vmem:[#allocation7 + $0xc] sm:$0xf]
    %v2895 = vld [vmem:[#allocation7 + $0x10] sm:$0xf]
    %v2896 = vld [vmem:[#allocation7 + $0x14] sm:$0xf]
    %v2897 = vld [vmem:[#allocation7 + $0x18] sm:$0xf]
    %v2898 = vld [vmem:[#allocation7 + $0x1c] sm:$0xf]
    %v2899 = vld [vmem:[#allocation7 + $0x20] sm:$0xf]
    %v2900 = vld [vmem:[#allocation7 + $0x24] sm:$0xf]
    %v2901 = vld [vmem:[#allocation7 + $0x28] sm:$0xf]
    %v2902 = vld [vmem:[#allocation7 + $0x2c] sm:$0xf]
    %v2903 = vld [vmem:[#allocation7 + $0x30] sm:$0xf]
    %v2904 = vld [vmem:[#allocation7 + $0x34] sm:$0xf]
    %v2905 = vld [vmem:[#allocation7 + $0x38] sm:$0xf]
    %v2906 = vld [vmem:[#allocation7 + $0x3c] sm:$0xf]
    %v2907 = vld [vmem:[#allocation7 + $0x40] sm:$0xf]
    %v2908 = vld [vmem:[#allocation7 + $0x44] sm:$0xf]
    %v2909 = vld [vmem:[#allocation7 + $0x48] sm:$0xf]
    %v2910 = vld [vmem:[#allocation7 + $0x4c] sm:$0xf]
    %v2911 = vld [vmem:[#allocation7 + $0x50] sm:$0xf]
    %v2912 = vld [vmem:[#allocation7 + $0x54] sm:$0xf]
    %v2913 = vld [vmem:[#allocation7 + $0x58] sm:$0xf]
    %v2914 = vld [vmem:[#allocation7 + $0x5c] sm:$0xf]
    %v2915 = vld [vmem:[#allocation7 + $0x60] sm:$0xf]
    %v2916 = vld [vmem:[#allocation7 + $0x64] sm:$0xf]
    %v2917 = vld [vmem:[#allocation7 + $0x68] sm:$0xf]
    %v2918 = vld [vmem:[#allocation7 + $0x6c] sm:$0xf]
    %v2919 = vld [vmem:[#allocation7 + $0x70] sm:$0xf]
    %v2920 = vld [vmem:[#allocation7 + $0x74] sm:$0xf]
    %v2921 = vld [vmem:[#allocation7 + $0x78] sm:$0xf]
    %v2922 = vld [vmem:[#allocation7 + $0x7c] sm:$0xf]
    %v2923 = vld [vmem:[#allocation7 + $0x80] sm:$0xf]
    %v2924 = vld [vmem:[#allocation7 + $0x84] sm:$0xf]
    %v2925 = vld [vmem:[#allocation7 + $0x88] sm:$0xf]
    %v2926 = vld [vmem:[#allocation7 + $0x8c] sm:$0xf]
    %v2927 = vld [vmem:[#allocation7 + $0x90] sm:$0xf]
    %v2928 = vld [vmem:[#allocation7 + $0x94] sm:$0xf]
    %v2929 = vld [vmem:[#allocation7 + $0x98] sm:$0xf]
    %v2930 = vld [vmem:[#allocation7 + $0x9c] sm:$0xf]
    %v2931 = vld [vmem:[#allocation7 + $0xa0] sm:$0xf]
    %v2932 = vld [vmem:[#allocation7 + $0xa4] sm:$0xf]
    %v2933 = vld [vmem:[#allocation7 + $0xa8] sm:$0xf]
    %v2934 = vld [vmem:[#allocation7 + $0xac] sm:$0xf]
    %v2935 = vld [vmem:[#allocation7 + $0xb0] sm:$0xf]
    %v2936 = vld [vmem:[#allocation7 + $0xb4] sm:$0xf]
    %v2937 = vld [vmem:[#allocation7 + $0xb8] sm:$0xf]
    %v2938 = vld [vmem:[#allocation7 + $0xbc] sm:$0xf]
    %v2939 = vld [vmem:[#allocation7 + $0xc0] sm:$0xf]
    %v2940 = vld [vmem:[#allocation7 + $0xc4] sm:$0xf]
    %v2941 = vld [vmem:[#allocation7 + $0xc8] sm:$0xf]
    %v2942 = vld [vmem:[#allocation7 + $0xcc] sm:$0xf]
    %v2943 = vld [vmem:[#allocation7 + $0xd0] sm:$0xf]
    %v2944 = vld [vmem:[#allocation7 + $0xd4] sm:$0xf]
    %v2945 = vld [vmem:[#allocation7 + $0xd8] sm:$0xf]
    %v2946 = vld [vmem:[#allocation7 + $0xdc] sm:$0xf]
    %v2947 = vld [vmem:[#allocation7 + $0xe0] sm:$0xf]
    %v2948 = vld [vmem:[#allocation7 + $0xe4] sm:$0xf]
    %v2949 = vld [vmem:[#allocation7 + $0xe8] sm:$0xf]
    %v2950 = vld [vmem:[#allocation7 + $0xec] sm:$0xf]
    %v2951 = vld [vmem:[#allocation7 + $0xf0] sm:$0xf]
    %v2952 = vld [vmem:[#allocation7 + $0xf4] sm:$0xf]
    %v2953 = vld [vmem:[#allocation7 + $0xf8] sm:$0xf]
    %v2954 = vld [vmem:[#allocation7 + $0xfc] sm:$0xf]
    %v2955 = vld [vmem:[%s6] sm:$0x1]
    %v2957 = vperm.slane %v2955, 0
    %v3023 = vunpack.c.l.b16 %v2891
    %v3024 = vunpack.c.l.b16 %v2892
    %v3025 = vunpack.c.l.b16 %v2893
    %v3026 = vunpack.c.l.b16 %v2894
    %v3027 = vunpack.c.l.b16 %v2895
    %v3028 = vunpack.c.l.b16 %v2896
    %v3029 = vunpack.c.l.b16 %v2897
    %v3030 = vunpack.c.l.b16 %v2898
    %v3031 = vunpack.c.l.b16 %v2899
    %v3032 = vunpack.c.l.b16 %v2900
    %v3033 = vunpack.c.l.b16 %v2901
    %v3034 = vunpack.c.l.b16 %v2902
    %v3035 = vunpack.c.l.b16 %v2903
    %v3036 = vunpack.c.l.b16 %v2904
    %v3037 = vunpack.c.l.b16 %v2905
    %v3038 = vunpack.c.l.b16 %v2906
    %v3039 = vunpack.c.l.b16 %v2907
    %v3040 = vunpack.c.l.b16 %v2908
    %v3041 = vunpack.c.l.b16 %v2909
    %v3042 = vunpack.c.l.b16 %v2910
    %v3043 = vunpack.c.l.b16 %v2911
    %v3044 = vunpack.c.l.b16 %v2912
    %v3045 = vunpack.c.l.b16 %v2913
    %v3046 = vunpack.c.l.b16 %v2914
    %v3047 = vunpack.c.l.b16 %v2915
    %v3048 = vunpack.c.l.b16 %v2916
    %v3049 = vunpack.c.l.b16 %v2917
    %v3050 = vunpack.c.l.b16 %v2918
    %v3051 = vunpack.c.l.b16 %v2919
    %v3052 = vunpack.c.l.b16 %v2920
    %v3053 = vunpack.c.l.b16 %v2921
    %v3054 = vunpack.c.l.b16 %v2922
    %v3055 = vunpack.c.l.b16 %v2923
    %v3056 = vunpack.c.l.b16 %v2924
    %v3057 = vunpack.c.l.b16 %v2925
    %v3058 = vunpack.c.l.b16 %v2926
    %v3059 = vunpack.c.l.b16 %v2927
    %v3060 = vunpack.c.l.b16 %v2928
    %v3061 = vunpack.c.l.b16 %v2929
    %v3062 = vunpack.c.l.b16 %v2930
    %v3063 = vunpack.c.l.b16 %v2931
    %v3064 = vunpack.c.l.b16 %v2932
    %v3065 = vunpack.c.l.b16 %v2933
    %v3066 = vunpack.c.l.b16 %v2934
    %v3067 = vunpack.c.l.b16 %v2935
    %v3068 = vunpack.c.l.b16 %v2936
    %v3069 = vunpack.c.l.b16 %v2937
    %v3070 = vunpack.c.l.b16 %v2938
    %v3071 = vunpack.c.l.b16 %v2939
    %v3072 = vunpack.c.l.b16 %v2940
    %v3073 = vunpack.c.l.b16 %v2941
    %v3074 = vunpack.c.l.b16 %v2942
    %v3075 = vunpack.c.l.b16 %v2943
    %v3076 = vunpack.c.l.b16 %v2944
    %v3077 = vunpack.c.l.b16 %v2945
    %v3078 = vunpack.c.l.b16 %v2946
    %v3079 = vunpack.c.l.b16 %v2947
    %v3080 = vunpack.c.l.b16 %v2948
    %v3081 = vunpack.c.l.b16 %v2949
    %v3082 = vunpack.c.l.b16 %v2950
    %v3083 = vunpack.c.l.b16 %v2951
    %v3084 = vunpack.c.l.b16 %v2952
    %v3085 = vunpack.c.l.b16 %v2953
    %v3086 = vunpack.c.l.b16 %v2954
    %v3087 = vpack.c.b16 %v3024, %v3023
    %v3088 = vpack.c.b16 %v3026, %v3025
    %v3089 = vpack.c.b16 %v3028, %v3027
    %v3090 = vpack.c.b16 %v3030, %v3029
    %v3091 = vpack.c.b16 %v3032, %v3031
    %v3092 = vpack.c.b16 %v3034, %v3033
    %v3093 = vpack.c.b16 %v3036, %v3035
    %v3094 = vpack.c.b16 %v3038, %v3037
    %v3095 = vpack.c.b16 %v3040, %v3039
    %v3096 = vpack.c.b16 %v3042, %v3041
    %v3097 = vpack.c.b16 %v3044, %v3043
    %v3098 = vpack.c.b16 %v3046, %v3045
    %v3099 = vpack.c.b16 %v3048, %v3047
    %v3100 = vpack.c.b16 %v3050, %v3049
    %v3101 = vpack.c.b16 %v3052, %v3051
    %v3102 = vpack.c.b16 %v3054, %v3053
    %v3103 = vpack.c.b16 %v3056, %v3055
    %v3104 = vpack.c.b16 %v3058, %v3057
    %v3105 = vpack.c.b16 %v3060, %v3059
    %v3106 = vpack.c.b16 %v3062, %v3061
    %v3107 = vpack.c.b16 %v3064, %v3063
    %v3108 = vpack.c.b16 %v3066, %v3065
    %v3109 = vpack.c.b16 %v3068, %v3067
    %v3110 = vpack.c.b16 %v3070, %v3069
    %v3111 = vpack.c.b16 %v3072, %v3071
    %v3112 = vpack.c.b16 %v3074, %v3073
    %v3113 = vpack.c.b16 %v3076, %v3075
    %v3114 = vpack.c.b16 %v3078, %v3077
    %v3115 = vpack.c.b16 %v3080, %v3079
    %v3116 = vpack.c.b16 %v3082, %v3081
    %v3117 = vpack.c.b16 %v3084, %v3083
    %v3118 = vpack.c.b16 %v3086, %v3085
    %3151 = vmatpush.bf16.msra.mxu0 %v3094
    %3152 = vmatpush.bf16.msra.mxu0 %v3093
    %3153 = vmatpush.bf16.msra.mxu0 %v3092
    %3154 = vmatpush.bf16.msra.mxu0 %v3091
    %3155 = vmatpush.bf16.msra.mxu0 %v3090
    %3156 = vmatpush.bf16.msra.mxu0 %v3089
    %3157 = vmatpush.bf16.msra.mxu0 %v3088
    %3158 = vmatpush.bf16.msra.mxu0 %v3087
    %3159 = vmatmul.bf16.gmra.mxu0 %v2887
    %v3160 = vpop.f32.mrf.mxu0
    %v3161 = vadd.f32 %v2957, %v3160
    %v3162 = vpop.f32.mrf.mxu0
    %v3163 = vadd.f32 %v2957, %v3162
    %3164 = vdwg.mxu0
    %3165 = vmatpush.bf16.msra.mxu0 %v3102
    %3166 = vmatpush.bf16.msra.mxu0 %v3101
    %3167 = vmatpush.bf16.msra.mxu0 %v3100
    %3168 = vmatpush.bf16.msra.mxu0 %v3099
    %3169 = vmatpush.bf16.msra.mxu0 %v3098
    %3170 = vmatpush.bf16.msra.mxu0 %v3097
    %3171 = vmatpush.bf16.msra.mxu0 %v3096
    %3172 = vmatpush.bf16.msra.mxu0 %v3095
    %3173 = vmatmul.bf16.gmra.mxu0 %v2888
    %v3174 = vpop.f32.mrf.mxu0
    %v3175 = vadd.f32 %v3161, %v3174
    %v3176 = vpop.f32.mrf.mxu0
    %v3177 = vadd.f32 %v3163, %v3176
    %3178 = vdwg.mxu0
    %3179 = vmatpush.bf16.msra.mxu0 %v3110
    %3180 = vmatpush.bf16.msra.mxu0 %v3109
    %3181 = vmatpush.bf16.msra.mxu0 %v3108
    %3182 = vmatpush.bf16.msra.mxu0 %v3107
    %3183 = vmatpush.bf16.msra.mxu0 %v3106
    %3184 = vmatpush.bf16.msra.mxu0 %v3105
    %3185 = vmatpush.bf16.msra.mxu0 %v3104
    %3186 = vmatpush.bf16.msra.mxu0 %v3103
    %3187 = vmatmul.bf16.gmra.mxu0 %v2889
    %v3188 = vpop.f32.mrf.mxu0
    %v3189 = vadd.f32 %v3175, %v3188
    %v3190 = vpop.f32.mrf.mxu0
    %v3191 = vadd.f32 %v3177, %v3190
    %3192 = vdwg.mxu0
    %3193 = vmatpush.bf16.msra.mxu0 %v3118
    %3194 = vmatpush.bf16.msra.mxu0 %v3117
    %3195 = vmatpush.bf16.msra.mxu0 %v3116
    %3196 = vmatpush.bf16.msra.mxu0 %v3115
    %3197 = vmatpush.bf16.msra.mxu0 %v3114
    %3198 = vmatpush.bf16.msra.mxu0 %v3113
    %3199 = vmatpush.bf16.msra.mxu0 %v3112
    %3200 = vmatpush.bf16.msra.mxu0 %v3111
    %3201 = vmatmul.bf16.gmra.mxu0 %v2890
    %v3202 = vpop.f32.mrf.mxu0
    %v3203 = vadd.f32 %v3189, %v3202
    %v3204 = vpop.f32.mrf.mxu0
    %v3205 = vadd.f32 %v3191, %v3204
    %3206 = vdwg.mxu0
    %3207 = vst [vmem:[#allocation8] sm:$0xff] %v3203
    %3208 = vst [vmem:[#allocation8 + $0x8] sm:$0xff] %v3205
    // Predicated region
    $region42: #{cnn_classifier_forward.1} parent=1 // pred_check
      _
    $region43: #{cnn_classifier_forward.1} parent=1 // pred_check_branch
      %3210 = sbr.rel (0) target = $region45
    $region44: #{cnn_classifier_forward.1} parent=1 // pred_region
      %3212 = vsyncadd [#allocation4], 224
      %s3213 = sshll.u32 [#allocation8], 4
      %s3214 = int_to_ptr.vmem [resolvable:$true] %s3213
      %s3215 = sshll.u32 %s7, 4
      %s3216 = int_to_ptr.hbm [resolvable:$true] %s3215
      %3221 = dma.vmem_to_hbm [thread:$0]  %s3214, 32, %s3216, [#allocation4], 32, 32, 2
    $region45: #{cnn_classifier_forward.1} parent=1 // pred_fallthru
      _
    // Predicated region
    $region46: #{cnn_classifier_forward.1} parent=1 // pred_check
      _
    $region47: #{cnn_classifier_forward.1} parent=1 // pred_check_branch
      %3223 = sbr.rel (0) target = $region49
    $region48: #{cnn_classifier_forward.1} parent=1 // pred_region
      %3225 = dma.done [#allocation4], 256
    $region49: #{cnn_classifier_forward.1} parent=1 // pred_fallthru
      _
    %3226 = vsyncpa [#allocation3], 1
    %3227 = vsyncpa [#allocation6], 1
    %3228 = vsyncpa [#allocation4], 1

</llo_original>
